<compile_context>
chip_gen: v6e
topology: v6e:2x2x1
jax: 0.10.0
libtpu: 0.0.40
codegen_flags: <defaults>
</compile_context>

<pallas_src>
import jax
import jax.numpy as jnp
import numpy as np
from jax.experimental import pallas as pl
from jax.experimental.pallas import tpu as pltpu


def text_sa_kernel(local_ref, rawg_ref, wl_ref, bl_ref, wg_ref, bg_ref,
                   wc_ref, bc_ref, out_ref):
    TB, L, D = local_ref.shape

    lx = local_ref[...]                                 # (TB, L, D) f32, kept full
                                                        # precision for the weighted sum.

    # ---- embedding_local: Linear -> Tanh (Dropout = identity, eval mode) ----
    # Collapse (TB, L) -> M = TB*L so the MXU sees one tall tile.
    l2 = lx.reshape(TB * L, D).astype(jnp.bfloat16)
    l_emb = jnp.tanh(
        jnp.dot(l2, wl_ref[...], preferred_element_type=jnp.float32) + bl_ref[...]
    ).reshape(TB, L, D)                                 # (TB, L, D) f32

    # ---- embedding_global: Linear -> Tanh, batched over the TB rows ----
    g = rawg_ref[...].astype(jnp.bfloat16)              # (TB, D)
    g_emb = jnp.tanh(
        jnp.dot(g, wg_ref[...], preferred_element_type=jnp.float32) + bg_ref[...]
    )                                                   # (TB, D) f32

    # embedding_common: Linear(D -> 1) applied to (l_emb * g_emb).
    # Fold the (1, D) weight row into g_emb first so the (TB, L, D) `common`
    # tensor is never materialized:
    #   sum_D(l_emb * g_emb * wc) = sum_D(l_emb * (g_emb * wc))
    gw = g_emb * wc_ref[...]                            # (TB, D) VPU mul
    logits = (jnp.sum(l_emb * gw[:, None, :], axis=-1, keepdims=True)
              + bc_ref[0])                              # (TB, L, 1)

    # softmax over the word axis (torch dim=1), per batch element.
    m = jnp.max(logits, axis=1, keepdims=True)          # (TB, 1, 1)
    e = jnp.exp(logits - m)                             # (TB, L, 1)
    denom = jnp.sum(e, axis=1, keepdims=True)           # (TB, 1, 1)
    # Approx EUP reciprocal: the per-row scale error cancels exactly in l2norm.
    wts = e * pl.reciprocal(denom, approx=True)         # (TB, L, 1)

    # new_global = sum_L weights * local (local kept in f32)
    new_global = jnp.sum(wts * lx, axis=1)              # (TB, D)

    # l2norm(new_global, dim=-1): x / (sqrt(sum x^2) + eps). Exact divide -- the
    # approx-reciprocal error would land directly in the output here.
    norm = jnp.sqrt(jnp.sum(new_global * new_global, axis=-1, keepdims=True)) + 1e-8
    out_ref[...] = (new_global / norm).astype(out_ref.dtype)


def _round_up(x, m):
    return ((x + m - 1) // m) * m


def text_sa(local, raw_global, wl, bl, wg, bg, wc, bc, *, tb=None):
    B, L, D = local.shape
    # Assumes L % 8 == 0 and D % 128 == 0 for clean (8,128) tiling of the
    # (TB*L, D) matmul view; other shapes still lower (blocks equal the full
    # array dims) but may pay reshape copies.

    # Batch-tile selection:
    #  * small batches -> one grid step (no per-step overhead, minimal padding),
    #  * larger batches -> <=64-row tiles with near-balanced steps.
    # TODO(synk): on v7x (2 TensorCores) a 2-step balanced split of a small batch
    # would be preferable; not chip-dispatched here.
    if tb is None:
        b8 = _round_up(B, 8)
        if b8 <= 64:
            tb = b8
        else:
            steps = -(-b8 // 64)
            tb = _round_up(-(-b8 // steps), 8)
    tb = max(8, _round_up(tb, 8))

    Bp = tb * pl.cdiv(B, tb)
    if Bp != B:
        # Padded (all-zero) rows produce exactly 0 output (uniform softmax over
        # zeros -> zero weighted sum -> 0 / 1e-8 = 0) and are sliced off below.
        local = jnp.pad(local, ((0, Bp - B), (0, 0), (0, 0)))
        raw_global = jnp.pad(raw_global, ((0, Bp - B), (0, 0)))

    # bf16 matmul operands (accumulation stays f32 inside the kernel); also
    # halves HBM->VMEM bytes for the weight matrices.
    wl_bf = wl.astype(jnp.bfloat16)
    wg_bf = wg.astype(jnp.bfloat16)

    # Tiny, accurate cost estimate: lets XLA schedule/overlap the surrounding
    # ops instead of treating the call as opaque.
    flops = 2 * Bp * L * D * D + 2 * Bp * D * D + 8 * Bp * L * D
    transcendentals = Bp * L * D + Bp * D + Bp * L
    bytes_accessed = (Bp * L * D * 4 + Bp * D * 4          # local, raw_global
                      + 2 * D * D * 2 + 2 * D * 4 + D * 4  # weights / biases
                      + 4 + Bp * D * 4)                    # bc, output
    cost = pl.CostEstimate(flops=flops,
                           transcendentals=transcendentals,
                           bytes_accessed=bytes_accessed)

    out = pl.pallas_call(
        text_sa_kernel,
        out_shape=jax.ShapeDtypeStruct((Bp, D), local.dtype),
        grid_spec=pltpu.PrefetchScalarGridSpec(
            num_scalar_prefetch=0,
            grid=(Bp // tb,),
            in_specs=[
                pl.BlockSpec((tb, L, D), lambda b: (b, 0, 0)),   # local
                pl.BlockSpec((tb, D), lambda b: (b, 0)),         # raw_global
                pl.BlockSpec((D, D), lambda b: (0, 0)),          # W_local (bf16)
                pl.BlockSpec((1, D), lambda b: (0, 0)),          # b_local
                pl.BlockSpec((D, D), lambda b: (0, 0)),          # W_global (bf16)
                pl.BlockSpec((1, D), lambda b: (0, 0)),          # b_global
                pl.BlockSpec((1, D), lambda b: (0, 0)),          # W_common (row)
                pl.BlockSpec(memory_space=pltpu.MemorySpace.SMEM),  # b_common f32[1]
            ],
            out_specs=pl.BlockSpec((tb, D), lambda b: (b, 0)),
        ),
        compiler_params=pltpu.CompilerParams(
            dimension_semantics=("parallel",),   # batch axis shardable over 2 TCs (v7x)
        ),
        cost_estimate=cost,
    )(local, raw_global, wl_bf, bl, wg_bf, bg, wc, bc)
    return out[:B]


def init_params(key, embed_dim):
    # Matches TextSA.init_weights: uniform(-r, r) with r = sqrt(6)/sqrt(in+out),
    # biases = 0. Weights stored as (in, out).
    k1, k2, k3 = jax.random.split(key, 3)
    r_sq = np.sqrt(6.0) / np.sqrt(embed_dim + embed_dim)
    r_c = np.sqrt(6.0) / np.sqrt(embed_dim + 1)
    wl = jax.random.uniform(k1, (embed_dim, embed_dim), jnp.float32, -r_sq, r_sq)
    wg = jax.random.uniform(k2, (embed_dim, embed_dim), jnp.float32, -r_sq, r_sq)
    wc = jax.random.uniform(k3, (1, embed_dim), jnp.float32, -r_c, r_c)
    bl = jnp.zeros((1, embed_dim), jnp.float32)
    bg = jnp.zeros((1, embed_dim), jnp.float32)
    bc = jnp.zeros((1,), jnp.float32)                     # 1-D scalar for SMEM
    return wl, bl, wg, bg, wc, bc


def text_sa_ref(local, raw_global, wl, bl, wg, bg, wc, bc):
    # Pure-JAX f32 reference for a sanity check.
    l_emb = jnp.tanh(local @ wl + bl)                         # (B, L, D)
    g_emb = jnp.tanh(raw_global @ wg + bg)                    # (B, D)
    common = l_emb * g_emb[:, None, :]                        # (B, L, D)
    logits = jnp.sum(common * wc[0], axis=-1) + bc[0]         # (B, L)
    wts = jax.nn.softmax(logits, axis=1)                      # (B, L)
    new_global = jnp.sum(wts[:, :, None] * local, axis=1)     # (B, D)
    norm = jnp.sqrt(jnp.sum(new_global ** 2, axis=-1, keepdims=True)) + 1e-8
    return new_global / norm


if __name__ == "__main__":
    # B deliberately not a multiple of 8 to exercise the (minimal) padding path.
    B, L, D = 20, 8, 128

    key = jax.random.PRNGKey(0)
    kp, kl = jax.random.split(key, 2)
    wl, bl, wg, bg, wc, bc = init_params(kp, D)

    local = jax.random.normal(kl, (B, L, D), jnp.float32)
    raw_global = jnp.mean(local, axis=1)   # "raw text by averaging words"

    out = text_sa(local, raw_global, wl, bl, wg, bg, wc, bc)
    out = jax.block_until_ready(out)
    assert out.shape == (B, D)

    ref = text_sa_ref(local, raw_global, wl, bl, wg, bg, wc, bc)
    # bf16 MXU operands + approx EUP softmax reciprocal => compare at bf16-level
    # tolerance against the pure-f32 reference.
    np.testing.assert_allclose(np.asarray(out), np.asarray(ref), rtol=2e-2, atol=2e-2)

    # TODO(synk): dropout is treated as identity (eval mode); training-mode dropout not implemented.
    print("KERNEL_OK")
</pallas_src>

<mosaic_0001>
module attributes {stable_mosaic.version = 11 : i64} {
  func.func @text_sa_kernel(%arg0: i32, %arg1: memref<24x8x128xf32, #tpu.memory_space<vmem>>, %arg2: memref<24x128xf32, #tpu.memory_space<vmem>>, %arg3: memref<128x128xbf16, #tpu.memory_space<vmem>>, %arg4: memref<1x128xf32, #tpu.memory_space<vmem>>, %arg5: memref<128x128xbf16, #tpu.memory_space<vmem>>, %arg6: memref<1x128xf32, #tpu.memory_space<vmem>>, %arg7: memref<1x128xf32, #tpu.memory_space<vmem>>, %arg8: memref<1xf32, #tpu.memory_space<smem>>, %arg9: memref<24x128xf32, #tpu.memory_space<vmem>>) attributes {dimension_semantics = [#tpu.dimension_semantics<parallel>], iteration_bounds = array<i64: 1>, scalar_prefetch = 0 : i64, scratch_operands = 0 : i64, tpu.core_type = #tpu.core_type<tc>, window_params = [{transform_indices = @transform_0, window_bounds = array<i64: 24, 8, 128>}, {transform_indices = @transform_1, window_bounds = array<i64: 24, 128>}, {pipeline_mode = #tpu.pipeline_mode<synchronous>, transform_indices = @transform_2, window_bounds = array<i64: 128, 128>}, {pipeline_mode = #tpu.pipeline_mode<synchronous>, transform_indices = @transform_3, window_bounds = array<i64: 1, 128>}, {pipeline_mode = #tpu.pipeline_mode<synchronous>, transform_indices = @transform_4, window_bounds = array<i64: 128, 128>}, {pipeline_mode = #tpu.pipeline_mode<synchronous>, transform_indices = @transform_5, window_bounds = array<i64: 1, 128>}, {pipeline_mode = #tpu.pipeline_mode<synchronous>, transform_indices = @transform_6, window_bounds = array<i64: 1, 128>}, {transform_indices = @transform_7, window_bounds = array<i64: 1>}, {transform_indices = @transform_8, window_bounds = array<i64: 24, 128>}]} {
    %c0 = arith.constant 0 : index
    %c0_0 = arith.constant 0 : index
    %c0_1 = arith.constant 0 : index
    %0 = vector.load %arg1[%c0, %c0_0, %c0_1] : memref<24x8x128xf32, #tpu.memory_space<vmem>>, vector<24x8x128xf32>
    %1 = vector.shape_cast %0 : vector<24x8x128xf32> to vector<192x128xf32>
    %2 = arith.truncf %1 : vector<192x128xf32> to vector<192x128xbf16>
    %c0_2 = arith.constant 0 : index
    %c0_3 = arith.constant 0 : index
    %3 = vector.load %arg3[%c0_2, %c0_3] : memref<128x128xbf16, #tpu.memory_space<vmem>>, vector<128x128xbf16>
    %cst = arith.constant dense<0.000000e+00> : vector<192x128xf32>
    %4 = tpu.matmul %2, %3, %cst {dimension_numbers = #tpu.dot_dimension_numbers<[1], [0], [0], [1], [0, 0, 1, 1], [], []>} : vector<192x128xbf16>, vector<128x128xbf16>, vector<192x128xf32> -> vector<192x128xf32>
    %c0_4 = arith.constant 0 : index
    %c0_5 = arith.constant 0 : index
    %5 = vector.load %arg4[%c0_4, %c0_5] : memref<1x128xf32, #tpu.memory_space<vmem>>, vector<1x128xf32>
    %6 = vector.broadcast %5 : vector<1x128xf32> to vector<192x128xf32>
    %7 = arith.addf %4, %6 : vector<192x128xf32>
    %8 = math.tanh %7 : vector<192x128xf32>
    %9 = vector.shape_cast %8 : vector<192x128xf32> to vector<24x8x128xf32>
    %c0_6 = arith.constant 0 : index
    %c0_7 = arith.constant 0 : index
    %10 = vector.load %arg2[%c0_6, %c0_7] : memref<24x128xf32, #tpu.memory_space<vmem>>, vector<24x128xf32>
    %11 = arith.truncf %10 : vector<24x128xf32> to vector<24x128xbf16>
    %c0_8 = arith.constant 0 : index
    %c0_9 = arith.constant 0 : index
    %12 = vector.load %arg5[%c0_8, %c0_9] : memref<128x128xbf16, #tpu.memory_space<vmem>>, vector<128x128xbf16>
    %cst_10 = arith.constant dense<0.000000e+00> : vector<24x128xf32>
    %13 = tpu.matmul %11, %12, %cst_10 {dimension_numbers = #tpu.dot_dimension_numbers<[1], [0], [0], [1], [0, 0, 1, 1], [], []>} : vector<24x128xbf16>, vector<128x128xbf16>, vector<24x128xf32> -> vector<24x128xf32>
    %c0_11 = arith.constant 0 : index
    %c0_12 = arith.constant 0 : index
    %14 = vector.load %arg6[%c0_11, %c0_12] : memref<1x128xf32, #tpu.memory_space<vmem>>, vector<1x128xf32>
    %15 = vector.broadcast %14 : vector<1x128xf32> to vector<24x128xf32>
    %16 = arith.addf %13, %15 : vector<24x128xf32>
    %17 = math.tanh %16 : vector<24x128xf32>
    %c0_13 = arith.constant 0 : index
    %c0_14 = arith.constant 0 : index
    %18 = vector.load %arg7[%c0_13, %c0_14] : memref<1x128xf32, #tpu.memory_space<vmem>>, vector<1x128xf32>
    %19 = vector.broadcast %18 : vector<1x128xf32> to vector<24x128xf32>
    %20 = arith.mulf %17, %19 : vector<24x128xf32>
    %21 = vector.shape_cast %20 : vector<24x128xf32> to vector<24x1x128xf32>
    %22 = vector.broadcast %21 : vector<24x1x128xf32> to vector<24x8x128xf32>
    %23 = arith.mulf %9, %22 : vector<24x8x128xf32>
    %cst_15 = arith.constant dense<0.000000e+00> : vector<24x8xf32>
    %24 = vector.multi_reduction <add>, %23, %cst_15 [2] : vector<24x8x128xf32> to vector<24x8xf32>
    %25 = vector.shape_cast %24 : vector<24x8xf32> to vector<24x8x1xf32>
    %c0_16 = arith.constant 0 : index
    %26 = memref.load %arg8[%c0_16] : memref<1xf32, #tpu.memory_space<smem>>
    %27 = vector.broadcast %26 : f32 to vector<24x8x1xf32>
    %28 = arith.addf %25, %27 : vector<24x8x1xf32>
    %cst_17 = arith.constant dense<0xFF800000> : vector<24x1xf32>
    %29 = vector.multi_reduction <maximumf>, %28, %cst_17 [1] : vector<24x8x1xf32> to vector<24x1xf32>
    %30 = vector.shape_cast %29 : vector<24x1xf32> to vector<24x1x1xf32>
    %31 = vector.broadcast %30 : vector<24x1x1xf32> to vector<24x8x1xf32>
    %32 = arith.subf %28, %31 : vector<24x8x1xf32>
    %33 = math.exp %32 : vector<24x8x1xf32>
    %cst_18 = arith.constant dense<0.000000e+00> : vector<24x1xf32>
    %34 = vector.multi_reduction <add>, %33, %cst_18 [1] : vector<24x8x1xf32> to vector<24x1xf32>
    %35 = vector.shape_cast %34 : vector<24x1xf32> to vector<24x1x1xf32>
    %36 = tpu.reciprocal %35 {approx = true} : vector<24x1x1xf32> -> vector<24x1x1xf32>
    %37 = vector.broadcast %36 : vector<24x1x1xf32> to vector<24x8x1xf32>
    %38 = arith.mulf %33, %37 : vector<24x8x1xf32>
    %39 = vector.broadcast %38 : vector<24x8x1xf32> to vector<24x8x128xf32>
    %40 = arith.mulf %39, %0 : vector<24x8x128xf32>
    %cst_19 = arith.constant dense<0.000000e+00> : vector<24x128xf32>
    %41 = vector.multi_reduction <add>, %40, %cst_19 [1] : vector<24x8x128xf32> to vector<24x128xf32>
    %42 = arith.mulf %41, %41 : vector<24x128xf32>
    %cst_20 = arith.constant dense<0.000000e+00> : vector<24xf32>
    %43 = vector.multi_reduction <add>, %42, %cst_20 [1] : vector<24x128xf32> to vector<24xf32>
    %44 = vector.shape_cast %43 : vector<24xf32> to vector<24x1xf32>
    %45 = math.sqrt %44 : vector<24x1xf32>
    %cst_21 = arith.constant 9.99999993E-9 : f32
    %46 = vector.broadcast %cst_21 : f32 to vector<24x1xf32>
    %47 = arith.addf %45, %46 : vector<24x1xf32>
    %48 = vector.broadcast %47 : vector<24x1xf32> to vector<24x128xf32>
    %49 = arith.divf %41, %48 : vector<24x128xf32>
    %c0_22 = arith.constant 0 : index
    %c0_23 = arith.constant 0 : index
    %50 = vector.load %arg9[%c0_22, %c0_23] : memref<24x128xf32, #tpu.memory_space<vmem>>, vector<24x128xf32>
    tpu.vector_store %arg9[%c0_22, %c0_23], %49 {strides = array<i32>} : memref<24x128xf32, #tpu.memory_space<vmem>>, vector<24x128xf32>,
    return
  }
  func.func @transform_0(%arg0: i32) -> (i32, i32, i32) {
    %c0_i32 = arith.constant 0 : i32
    %c0_i32_0 = arith.constant 0 : i32
    %c0_i32_1 = arith.constant 0 : i32
    return %arg0, %c0_i32, %c0_i32_0 : i32, i32, i32
  }
  func.func @transform_1(%arg0: i32) -> (i32, i32) {
    %c0_i32 = arith.constant 0 : i32
    %c0_i32_0 = arith.constant 0 : i32
    return %arg0, %c0_i32 : i32, i32
  }
  func.func @transform_2(%arg0: i32) -> (i32, i32) {
    %c0_i32 = arith.constant 0 : i32
    %c0_i32_0 = arith.constant 0 : i32
    %c0_i32_1 = arith.constant 0 : i32
    return %c0_i32, %c0_i32_0 : i32, i32
  }
  func.func @transform_3(%arg0: i32) -> (i32, i32) {
    %c0_i32 = arith.constant 0 : i32
    %c0_i32_0 = arith.constant 0 : i32
    %c0_i32_1 = arith.constant 0 : i32
    return %c0_i32, %c0_i32_0 : i32, i32
  }
  func.func @transform_4(%arg0: i32) -> (i32, i32) {
    %c0_i32 = arith.constant 0 : i32
    %c0_i32_0 = arith.constant 0 : i32
    %c0_i32_1 = arith.constant 0 : i32
    return %c0_i32, %c0_i32_0 : i32, i32
  }
  func.func @transform_5(%arg0: i32) -> (i32, i32) {
    %c0_i32 = arith.constant 0 : i32
    %c0_i32_0 = arith.constant 0 : i32
    %c0_i32_1 = arith.constant 0 : i32
    return %c0_i32, %c0_i32_0 : i32, i32
  }
  func.func @transform_6(%arg0: i32) -> (i32, i32) {
    %c0_i32 = arith.constant 0 : i32
    %c0_i32_0 = arith.constant 0 : i32
    %c0_i32_1 = arith.constant 0 : i32
    return %c0_i32, %c0_i32_0 : i32, i32
  }
  func.func @transform_7(%arg0: i32) -> i32 {
    %c0_i32 = arith.constant 0 : i32
    %c0_i32_0 = arith.constant 0 : i32
    return %c0_i32 : i32
  }
  func.func @transform_8(%arg0: i32) -> (i32, i32) {
    %c0_i32 = arith.constant 0 : i32
    %c0_i32_0 = arith.constant 0 : i32
    return %arg0, %c0_i32 : i32, i32
  }
}

</mosaic_0001>

<llo_original>
// kernel: tpu_custom_call.1
$region0: #{tpu_custom_call.1}
  #allocation0 [shape = 'u32[]', space=smem, size = 0x4, offset = 0x4, fixed_abs, tag = 'smem constant byte address 0x4 - core index']
  #allocation1 [shape = 'u32[144,128]{1,0:T(1,128)}', space=vmem, size = 0x12000, scoped, tag = 'internal scratch']
  #allocation2 [shape = 'f32[1]{0:T(128)S(6)}', space=smem, size = 0x200, scoped, tag = 'scoped memory for tpu_custom_call.1']
  %s0 = inlined_call_operand.hbm [shape: f32[24,8,128], index: 0, kind: input, shape index: {}]
  %s1 = inlined_call_operand.hbm [shape: f32[24,128], index: 1, kind: input, shape index: {}]
  %s2 = inlined_call_operand.hbm [shape: bf16[128,128], index: 2, kind: input, shape index: {}]
  %s3 = inlined_call_operand.vmem [shape: f32[1,128], index: 3, kind: input, shape index: {}]
  %s4 = inlined_call_operand.hbm [shape: bf16[128,128], index: 4, kind: input, shape index: {}]
  %s5 = inlined_call_operand.vmem [shape: f32[1,128], index: 5, kind: input, shape index: {}]
  %s6 = inlined_call_operand.vmem [shape: f32[1,128], index: 6, kind: input, shape index: {}]
  %s7 = inlined_call_operand.<no memory space> [shape: f32[1], index: 7, kind: input, shape index: {}]
  %s8 = inlined_call_operand.hbm [shape: f32[24,128], index: 8, kind: output, shape index: {}]
  %s9 = sld [smem:[#allocation0]]
  $region58: #{tpu_custom_call.1} parent=0
    _
  %s11 = ssub.s32 1, %s9
  %s12 = scalar_select 0, %s11, %s9
  %13 = sst [smem:[#allocation2]] %s7
  $region1: #{tpu_custom_call.1} parent=0
    #allocation3 [shape = 'u8[98304]{0}', space=vmem, size = 0x18000, scoped, tag = 'input window, operand 0, single buffered']
    #allocation4 [shape = 's32[1]{0}', space=sflag, size = 0x4, scoped, tag = 'scoped memory for tpu_custom_call.1']
    #allocation5 [shape = 's32[1]{0}', space=sflag, size = 0x4, scoped, tag = 'scoped memory for tpu_custom_call.1']
    #allocation6 [shape = 'u8[12288]{0}', space=vmem, size = 0x3000, scoped, tag = 'input window, operand 1, single buffered']
    #allocation7 [shape = 's32[1]{0}', space=sflag, size = 0x4, scoped, tag = 'scoped memory for tpu_custom_call.1']
    #allocation8 [shape = 'u8[32768]{0}', space=vmem, size = 0x8000, scoped, tag = 'input window, operand 2, single buffered']
    #allocation9 [shape = 'u8[32768]{0}', space=vmem, size = 0x8000, scoped, tag = 'input window, operand 4, single buffered']
    #allocation10 [shape = 's32[1]{0}', space=sflag, size = 0x4, scoped, tag = 'scoped memory for tpu_custom_call.1']
    #allocation11 [shape = 'u8[12288]{0}', space=vmem, size = 0x3000, scoped, tag = 'output window, operand 0, single buffered']
    %14 = vsyncpa [#allocation4], 0
    %15 = vsyncpa [#allocation7], 0
    %16 = vsyncpa [#allocation10], 0
    %17 = vsyncpa [#allocation5], 0
    // Predicated region
    $region2: #{tpu_custom_call.1} parent=1 // pred_check
      _
    $region3: #{tpu_custom_call.1} parent=1 // pred_check_branch
      %19 = sbr.rel (0) target = $region5
    $region4: #{tpu_custom_call.1} parent=1 // pred_region
      %s21 = ssub.s32 3072, 3072
      %22 = vsyncadd [#allocation4], %s21
      %s23 = sshll.u32 [#allocation3], 4
      %s24 = int_to_ptr.vmem [resolvable:$true] %s23
      %29 = dma.hbm_to_vmem [thread:$0]  %s0, 3072, %s24, [#allocation4], 128, 128, 8
    $region5: #{tpu_custom_call.1} parent=1 // pred_fallthru
      _
    // Predicated region
    $region6: #{tpu_custom_call.1} parent=1 // pred_check
      _
    $region7: #{tpu_custom_call.1} parent=1 // pred_check_branch
      %31 = sbr.rel (0) target = $region9
    $region8: #{tpu_custom_call.1} parent=1 // pred_region
      %s33 = ssub.s32 384, 384
      %34 = vsyncadd [#allocation7], %s33
      %s35 = sshll.u32 [#allocation6], 4
      %s36 = int_to_ptr.vmem [resolvable:$true] %s35
      %41 = dma.hbm_to_vmem [thread:$0]  %s1, 384, %s36, [#allocation7], 128, 128, 8
    $region9: #{tpu_custom_call.1} parent=1 // pred_fallthru
      _
    // Predicated region
    $region10: #{tpu_custom_call.1} parent=1 // pred_check
      _
    $region11: #{tpu_custom_call.1} parent=1 // pred_check_branch
      %43 = sbr.rel (0) target = $region13
    $region12: #{tpu_custom_call.1} parent=1 // pred_region
      %s45 = ssub.s32 1024, 1024
      %46 = vsyncadd [#allocation7], %s45
      %s47 = sshll.u32 [#allocation8], 4
      %s48 = int_to_ptr.vmem [resolvable:$true] %s47
      %53 = dma.hbm_to_vmem [thread:$0]  %s2, 1024, %s48, [#allocation7], 64, 64, 4
    $region13: #{tpu_custom_call.1} parent=1 // pred_fallthru
      _
    // Predicated region
    $region14: #{tpu_custom_call.1} parent=1 // pred_check
      _
    $region15: #{tpu_custom_call.1} parent=1 // pred_check_branch
      %55 = sbr.rel (0) target = $region17
    $region16: #{tpu_custom_call.1} parent=1 // pred_region
      _
    $region17: #{tpu_custom_call.1} parent=1 // pred_fallthru
      _
    // Predicated region
    $region18: #{tpu_custom_call.1} parent=1 // pred_check
      _
    $region19: #{tpu_custom_call.1} parent=1 // pred_check_branch
      %57 = sbr.rel (0) target = $region21
    $region20: #{tpu_custom_call.1} parent=1 // pred_region
      %s59 = ssub.s32 1024, 1024
      %60 = vsyncadd [#allocation10], %s59
      %s61 = sshll.u32 [#allocation9], 4
      %s62 = int_to_ptr.vmem [resolvable:$true] %s61
      %67 = dma.hbm_to_vmem [thread:$0]  %s4, 1024, %s62, [#allocation10], 64, 64, 4
    $region21: #{tpu_custom_call.1} parent=1 // pred_fallthru
      _
    // Predicated region
    $region22: #{tpu_custom_call.1} parent=1 // pred_check
      _
    $region23: #{tpu_custom_call.1} parent=1 // pred_check_branch
      %69 = sbr.rel (0) target = $region25
    $region24: #{tpu_custom_call.1} parent=1 // pred_region
      _
    $region25: #{tpu_custom_call.1} parent=1 // pred_fallthru
      _
    // Predicated region
    $region26: #{tpu_custom_call.1} parent=1 // pred_check
      _
    $region27: #{tpu_custom_call.1} parent=1 // pred_check_branch
      %71 = sbr.rel (0) target = $region29
    $region28: #{tpu_custom_call.1} parent=1 // pred_region
      _
    $region29: #{tpu_custom_call.1} parent=1 // pred_fallthru
      _
    // Predicated region
    $region30: #{tpu_custom_call.1} parent=1 // pred_check
      _
    $region31: #{tpu_custom_call.1} parent=1 // pred_check_branch
      %73 = sbr.rel (0) target = $region33
    $region32: #{tpu_custom_call.1} parent=1 // pred_region
      _
    $region33: #{tpu_custom_call.1} parent=1 // pred_fallthru
      _
    // Predicated region
    $region34: #{tpu_custom_call.1} parent=1 // pred_check
      _
    $region35: #{tpu_custom_call.1} parent=1 // pred_check_branch
      %75 = sbr.rel (0) target = $region37
    $region36: #{tpu_custom_call.1} parent=1 // pred_region
      %76 = dma.done [#allocation4], 3072
    $region37: #{tpu_custom_call.1} parent=1 // pred_fallthru
      _
    // Predicated region
    $region38: #{tpu_custom_call.1} parent=1 // pred_check
      _
    $region39: #{tpu_custom_call.1} parent=1 // pred_check_branch
      %78 = sbr.rel (0) target = $region41
    $region40: #{tpu_custom_call.1} parent=1 // pred_region
      %79 = dma.done [#allocation7], 384
    $region41: #{tpu_custom_call.1} parent=1 // pred_fallthru
      _
    // Predicated region
    $region42: #{tpu_custom_call.1} parent=1 // pred_check
      _
    $region43: #{tpu_custom_call.1} parent=1 // pred_check_branch
      %81 = sbr.rel (0) target = $region45
    $region44: #{tpu_custom_call.1} parent=1 // pred_region
      %82 = dma.done [#allocation7], 1024
    $region45: #{tpu_custom_call.1} parent=1 // pred_fallthru
      _
    // Predicated region
    $region46: #{tpu_custom_call.1} parent=1 // pred_check
      _
    $region47: #{tpu_custom_call.1} parent=1 // pred_check_branch
      %84 = sbr.rel (0) target = $region49
    $region48: #{tpu_custom_call.1} parent=1 // pred_region
      %85 = dma.done [#allocation10], 1024
    $region49: #{tpu_custom_call.1} parent=1 // pred_fallthru
      _
    %v87 = vld [vmem:[#allocation3] sm:$0xff]
    %v88 = vld [vmem:[#allocation3 + $0x8] sm:$0xff]
    %v89 = vld [vmem:[#allocation3 + $0x10] sm:$0xff]
    %v90 = vld [vmem:[#allocation3 + $0x18] sm:$0xff]
    %v91 = vld [vmem:[#allocation3 + $0x20] sm:$0xff]
    %v92 = vld [vmem:[#allocation3 + $0x28] sm:$0xff]
    %v93 = vld [vmem:[#allocation3 + $0x30] sm:$0xff]
    %v94 = vld [vmem:[#allocation3 + $0x38] sm:$0xff]
    %v95 = vld [vmem:[#allocation3 + $0x40] sm:$0xff]
    %v96 = vld [vmem:[#allocation3 + $0x48] sm:$0xff]
    %v97 = vld [vmem:[#allocation3 + $0x50] sm:$0xff]
    %v98 = vld [vmem:[#allocation3 + $0x58] sm:$0xff]
    %v99 = vld [vmem:[#allocation3 + $0x60] sm:$0xff]
    %v100 = vld [vmem:[#allocation3 + $0x68] sm:$0xff]
    %v101 = vld [vmem:[#allocation3 + $0x70] sm:$0xff]
    %v102 = vld [vmem:[#allocation3 + $0x78] sm:$0xff]
    %v103 = vld [vmem:[#allocation3 + $0x80] sm:$0xff]
    %v104 = vld [vmem:[#allocation3 + $0x88] sm:$0xff]
    %v105 = vld [vmem:[#allocation3 + $0x90] sm:$0xff]
    %v106 = vld [vmem:[#allocation3 + $0x98] sm:$0xff]
    %v107 = vld [vmem:[#allocation3 + $0xa0] sm:$0xff]
    %v108 = vld [vmem:[#allocation3 + $0xa8] sm:$0xff]
    %v109 = vld [vmem:[#allocation3 + $0xb0] sm:$0xff]
    %v110 = vld [vmem:[#allocation3 + $0xb8] sm:$0xff]
    %v111 = vpack.c.bf16 %v88, %v87
    %v112 = vpack.c.bf16 %v90, %v89
    %v113 = vpack.c.bf16 %v92, %v91
    %v114 = vpack.c.bf16 %v94, %v93
    %v115 = vpack.c.bf16 %v96, %v95
    %v116 = vpack.c.bf16 %v98, %v97
    %v117 = vpack.c.bf16 %v100, %v99
    %v118 = vpack.c.bf16 %v102, %v101
    %v119 = vpack.c.bf16 %v104, %v103
    %v120 = vpack.c.bf16 %v106, %v105
    %v121 = vpack.c.bf16 %v108, %v107
    %v122 = vpack.c.bf16 %v110, %v109
    %v123 = vld [vmem:[#allocation8] sm:$0xf]
    %v124 = vld [vmem:[#allocation8 + $0x4] sm:$0xf]
    %v125 = vld [vmem:[#allocation8 + $0x8] sm:$0xf]
    %v126 = vld [vmem:[#allocation8 + $0xc] sm:$0xf]
    %v127 = vld [vmem:[#allocation8 + $0x10] sm:$0xf]
    %v128 = vld [vmem:[#allocation8 + $0x14] sm:$0xf]
    %v129 = vld [vmem:[#allocation8 + $0x18] sm:$0xf]
    %v130 = vld [vmem:[#allocation8 + $0x1c] sm:$0xf]
    %v131 = vld [vmem:[#allocation8 + $0x20] sm:$0xf]
    %v132 = vld [vmem:[#allocation8 + $0x24] sm:$0xf]
    %v133 = vld [vmem:[#allocation8 + $0x28] sm:$0xf]
    %v134 = vld [vmem:[#allocation8 + $0x2c] sm:$0xf]
    %v135 = vld [vmem:[#allocation8 + $0x30] sm:$0xf]
    %v136 = vld [vmem:[#allocation8 + $0x34] sm:$0xf]
    %v137 = vld [vmem:[#allocation8 + $0x38] sm:$0xf]
    %v138 = vld [vmem:[#allocation8 + $0x3c] sm:$0xf]
    %v139 = vld [vmem:[%s3] sm:$0x1]
    %v141 = vlaneseq
    %v142 = vshrl.u32 %v141, 7
    %v143 = vsub.s32 0, %v142
    %v144 = vrot.slane %v139, %v143
    %v162 = vunpack.c.l.b16 %v123
    %v163 = vunpack.c.l.b16 %v124
    %v164 = vunpack.c.l.b16 %v125
    %v165 = vunpack.c.l.b16 %v126
    %v166 = vunpack.c.l.b16 %v127
    %v167 = vunpack.c.l.b16 %v128
    %v168 = vunpack.c.l.b16 %v129
    %v169 = vunpack.c.l.b16 %v130
    %v170 = vunpack.c.l.b16 %v131
    %v171 = vunpack.c.l.b16 %v132
    %v172 = vunpack.c.l.b16 %v133
    %v173 = vunpack.c.l.b16 %v134
    %v174 = vunpack.c.l.b16 %v135
    %v175 = vunpack.c.l.b16 %v136
    %v176 = vunpack.c.l.b16 %v137
    %v177 = vunpack.c.l.b16 %v138
    %v178 = vpack.c.b16 %v163, %v162
    %v179 = vpack.c.b16 %v165, %v164
    %v180 = vpack.c.b16 %v167, %v166
    %v181 = vpack.c.b16 %v169, %v168
    %v182 = vpack.c.b16 %v171, %v170
    %v183 = vpack.c.b16 %v173, %v172
    %v184 = vpack.c.b16 %v175, %v174
    %v185 = vpack.c.b16 %v177, %v176
    %194 = vmatprep.subr.bf16.mxu0 0
    %195 = vmatpush1.bf16.msra.mxu0 %v185
    %196 = vmatprep.subr.bf16.mxu0 0
    %197 = vmatpush1.bf16.msra.mxu0 %v184
    %198 = vmatprep.subr.bf16.mxu0 0
    %199 = vmatpush1.bf16.msra.mxu0 %v183
    %200 = vmatprep.subr.bf16.mxu0 0
    %201 = vmatpush1.bf16.msra.mxu0 %v182
    %202 = vmatprep.subr.bf16.mxu0 0
    %203 = vmatpush1.bf16.msra.mxu0 %v181
    %204 = vmatprep.subr.bf16.mxu0 0
    %205 = vmatpush1.bf16.msra.mxu0 %v180
    %206 = vmatprep.subr.bf16.mxu0 0
    %207 = vmatpush1.bf16.msra.mxu0 %v179
    %208 = vmatprep.subr.bf16.mxu0 0
    %209 = vmatpush1.bf16.msra.mxu0 %v178
    %210 = vmatprep.subr.bf16.mxu0 0
    %211 = vmatpush2.bf16.msra.mxu0 0
    %212 = vmatprep.subr.bf16.mxu0 0
    %213 = vmatpush2.bf16.msra.mxu0 0
    %214 = vmatprep.subr.bf16.mxu0 0
    %215 = vmatpush2.bf16.msra.mxu0 0
    %216 = vmatprep.subr.bf16.mxu0 0
    %217 = vmatpush2.bf16.msra.mxu0 0
    %218 = vmatprep.subr.bf16.mxu0 0
    %219 = vmatpush2.bf16.msra.mxu0 0
    %220 = vmatprep.subr.bf16.mxu0 0
    %221 = vmatpush2.bf16.msra.mxu0 0
    %222 = vmatprep.subr.bf16.mxu0 0
    %223 = vmatpush2.bf16.msra.mxu0 0
    %224 = vmatprep.subr.bf16.mxu0 0
    %225 = vmatpush2.bf16.msra.mxu0 0
    %226 = vmatprep.mubr.bf16.mxu0 0
    %227 = vmatmul.mubr.bf16.gmra.mxu0 %v111
    %v228 = vpop.f32.mrf.mxu0
    %v229 = vadd.f32 %v144, %v228
    %v230 = vpop.f32.mrf.mxu0
    %v231 = vpop.f32.mrf.mxu0
    %v232 = vadd.f32 %v144, %v231
    %v233 = vpop.f32.mrf.mxu0
    %234 = vmatprep.mubr.bf16.mxu0 0
    %235 = vmatmul.mubr.bf16.gmra.mxu0 %v112
    %v236 = vpop.f32.mrf.mxu0
    %v237 = vadd.f32 %v144, %v236
    %v238 = vpop.f32.mrf.mxu0
    %v239 = vpop.f32.mrf.mxu0
    %v240 = vadd.f32 %v144, %v239
    %v241 = vpop.f32.mrf.mxu0
    %242 = vmatprep.mubr.bf16.mxu0 0
    %243 = vmatmul.mubr.bf16.gmra.mxu0 %v113
    %v244 = vpop.f32.mrf.mxu0
    %v245 = vadd.f32 %v144, %v244
    %v246 = vpop.f32.mrf.mxu0
    %v247 = vpop.f32.mrf.mxu0
    %v248 = vadd.f32 %v144, %v247
    %v249 = vpop.f32.mrf.mxu0
    %250 = vmatprep.mubr.bf16.mxu0 0
    %251 = vmatmul.mubr.bf16.gmra.mxu0 %v114
    %v252 = vpop.f32.mrf.mxu0
    %v253 = vadd.f32 %v144, %v252
    %v254 = vpop.f32.mrf.mxu0
    %v255 = vpop.f32.mrf.mxu0
    %v256 = vadd.f32 %v144, %v255
    %v257 = vpop.f32.mrf.mxu0
    %258 = vmatprep.mubr.bf16.mxu0 0
    %259 = vmatmul.mubr.bf16.gmra.mxu0 %v115
    %v260 = vpop.f32.mrf.mxu0
    %v261 = vadd.f32 %v144, %v260
    %v262 = vpop.f32.mrf.mxu0
    %v263 = vpop.f32.mrf.mxu0
    %v264 = vadd.f32 %v144, %v263
    %v265 = vpop.f32.mrf.mxu0
    %266 = vmatprep.mubr.bf16.mxu0 0
    %267 = vmatmul.mubr.bf16.gmra.mxu0 %v116
    %v268 = vpop.f32.mrf.mxu0
    %v269 = vadd.f32 %v144, %v268
    %v270 = vpop.f32.mrf.mxu0
    %v271 = vpop.f32.mrf.mxu0
    %v272 = vadd.f32 %v144, %v271
    %v273 = vpop.f32.mrf.mxu0
    %274 = vmatprep.mubr.bf16.mxu0 0
    %275 = vmatmul.mubr.bf16.gmra.mxu0 %v117
    %v276 = vpop.f32.mrf.mxu0
    %v277 = vadd.f32 %v144, %v276
    %v278 = vpop.f32.mrf.mxu0
    %v279 = vpop.f32.mrf.mxu0
    %v280 = vadd.f32 %v144, %v279
    %v281 = vpop.f32.mrf.mxu0
    %282 = vmatprep.mubr.bf16.mxu0 0
    %283 = vmatmul.mubr.bf16.gmra.mxu0 %v118
    %v284 = vpop.f32.mrf.mxu0
    %v285 = vadd.f32 %v144, %v284
    %v286 = vpop.f32.mrf.mxu0
    %v287 = vpop.f32.mrf.mxu0
    %v288 = vadd.f32 %v144, %v287
    %v289 = vpop.f32.mrf.mxu0
    %290 = vmatprep.mubr.bf16.mxu0 0
    %291 = vmatmul.mubr.bf16.gmra.mxu0 %v119
    %v292 = vpop.f32.mrf.mxu0
    %v293 = vadd.f32 %v144, %v292
    %v294 = vpop.f32.mrf.mxu0
    %v295 = vpop.f32.mrf.mxu0
    %v296 = vadd.f32 %v144, %v295
    %v297 = vpop.f32.mrf.mxu0
    %298 = vmatprep.mubr.bf16.mxu0 0
    %299 = vmatmul.mubr.bf16.gmra.mxu0 %v120
    %v300 = vpop.f32.mrf.mxu0
    %v301 = vadd.f32 %v144, %v300
    %v302 = vpop.f32.mrf.mxu0
    %v303 = vpop.f32.mrf.mxu0
    %v304 = vadd.f32 %v144, %v303
    %v305 = vpop.f32.mrf.mxu0
    %306 = vmatprep.mubr.bf16.mxu0 0
    %307 = vmatmul.mubr.bf16.gmra.mxu0 %v121
    %v308 = vpop.f32.mrf.mxu0
    %v309 = vadd.f32 %v144, %v308
    %v310 = vpop.f32.mrf.mxu0
    %v311 = vpop.f32.mrf.mxu0
    %v312 = vadd.f32 %v144, %v311
    %v313 = vpop.f32.mrf.mxu0
    %314 = vmatprep.mubr.bf16.mxu0 0
    %315 = vmatmul.mubr.bf16.gmra.mxu0 %v122
    %v316 = vpop.f32.mrf.mxu0
    %v317 = vadd.f32 %v144, %v316
    %v318 = vpop.f32.mrf.mxu0
    %v319 = vpop.f32.mrf.mxu0
    %v320 = vadd.f32 %v144, %v319
    %v321 = vpop.f32.mrf.mxu0
    %322 = vdwg.mxu0
    %v323 = vtanh.pop %v229
    %v324 = vtanh.pop %v232
    %v325 = vtanh.pop %v237
    %v326 = vtanh.pop %v240
    %v327 = vtanh.pop %v245
    %v328 = vtanh.pop %v248
    %v329 = vtanh.pop %v253
    %v330 = vtanh.pop %v256
    %v331 = vtanh.pop %v261
    %v332 = vtanh.pop %v264
    %v333 = vtanh.pop %v269
    %v334 = vtanh.pop %v272
    %v335 = vtanh.pop %v277
    %v336 = vtanh.pop %v280
    %v337 = vtanh.pop %v285
    %v338 = vtanh.pop %v288
    %v339 = vtanh.pop %v293
    %v340 = vtanh.pop %v296
    %v341 = vtanh.pop %v301
    %v342 = vtanh.pop %v304
    %v343 = vtanh.pop %v309
    %v344 = vtanh.pop %v312
    %v345 = vtanh.pop %v317
    %v346 = vtanh.pop %v320
    %v347 = vld [vmem:[#allocation6] sm:$0xff]
    %v348 = vld [vmem:[#allocation6 + $0x8] sm:$0xff]
    %v349 = vld [vmem:[#allocation6 + $0x10] sm:$0xff]
    %v350 = vpack.c.bf16 %v348, %v347
    %v351 = vpack.c.bf16 %v349, %v349
    %v352 = vld [vmem:[#allocation9] sm:$0xf]
    %v353 = vld [vmem:[#allocation9 + $0x4] sm:$0xf]
    %v354 = vld [vmem:[#allocation9 + $0x8] sm:$0xf]
    %v355 = vld [vmem:[#allocation9 + $0xc] sm:$0xf]
    %v356 = vld [vmem:[#allocation9 + $0x10] sm:$0xf]
    %v357 = vld [vmem:[#allocation9 + $0x14] sm:$0xf]
    %v358 = vld [vmem:[#allocation9 + $0x18] sm:$0xf]
    %v359 = vld [vmem:[#allocation9 + $0x1c] sm:$0xf]
    %v360 = vld [vmem:[#allocation9 + $0x20] sm:$0xf]
    %v361 = vld [vmem:[#allocation9 + $0x24] sm:$0xf]
    %v362 = vld [vmem:[#allocation9 + $0x28] sm:$0xf]
    %v363 = vld [vmem:[#allocation9 + $0x2c] sm:$0xf]
    %v364 = vld [vmem:[#allocation9 + $0x30] sm:$0xf]
    %v365 = vld [vmem:[#allocation9 + $0x34] sm:$0xf]
    %v366 = vld [vmem:[#allocation9 + $0x38] sm:$0xf]
    %v367 = vld [vmem:[#allocation9 + $0x3c] sm:$0xf]
    %v368 = vld [vmem:[%s5] sm:$0x1]
    %v370 = vlaneseq
    %v371 = vshrl.u32 %v370, 7
    %v372 = vsub.s32 0, %v371
    %v373 = vrot.slane %v368, %v372
    %v391 = vunpack.c.l.b16 %v352
    %v392 = vunpack.c.l.b16 %v353
    %v393 = vunpack.c.l.b16 %v354
    %v394 = vunpack.c.l.b16 %v355
    %v395 = vunpack.c.l.b16 %v356
    %v396 = vunpack.c.l.b16 %v357
    %v397 = vunpack.c.l.b16 %v358
    %v398 = vunpack.c.l.b16 %v359
    %v399 = vunpack.c.l.b16 %v360
    %v400 = vunpack.c.l.b16 %v361
    %v401 = vunpack.c.l.b16 %v362
    %v402 = vunpack.c.l.b16 %v363
    %v403 = vunpack.c.l.b16 %v364
    %v404 = vunpack.c.l.b16 %v365
    %v405 = vunpack.c.l.b16 %v366
    %v406 = vunpack.c.l.b16 %v367
    %v407 = vpack.c.b16 %v392, %v391
    %v408 = vpack.c.b16 %v394, %v393
    %v409 = vpack.c.b16 %v396, %v395
    %v410 = vpack.c.b16 %v398, %v397
    %v411 = vpack.c.b16 %v400, %v399
    %v412 = vpack.c.b16 %v402, %v401
    %v413 = vpack.c.b16 %v404, %v403
    %v414 = vpack.c.b16 %v406, %v405
    %423 = vmatprep.subr.bf16.mxu0 0
    %424 = vmatpush1.bf16.msra.mxu0 %v414
    %425 = vmatprep.subr.bf16.mxu0 0
    %426 = vmatpush1.bf16.msra.mxu0 %v413
    %427 = vmatprep.subr.bf16.mxu0 0
    %428 = vmatpush1.bf16.msra.mxu0 %v412
    %429 = vmatprep.subr.bf16.mxu0 0
    %430 = vmatpush1.bf16.msra.mxu0 %v411
    %431 = vmatprep.subr.bf16.mxu0 0
    %432 = vmatpush1.bf16.msra.mxu0 %v410
    %433 = vmatprep.subr.bf16.mxu0 0
    %434 = vmatpush1.bf16.msra.mxu0 %v409
    %435 = vmatprep.subr.bf16.mxu0 0
    %436 = vmatpush1.bf16.msra.mxu0 %v408
    %437 = vmatprep.subr.bf16.mxu0 0
    %438 = vmatpush1.bf16.msra.mxu0 %v407
    %439 = vmatprep.subr.bf16.mxu0 0
    %440 = vmatpush2.bf16.msra.mxu0 0
    %441 = vmatprep.subr.bf16.mxu0 0
    %442 = vmatpush2.bf16.msra.mxu0 0
    %443 = vmatprep.subr.bf16.mxu0 0
    %444 = vmatpush2.bf16.msra.mxu0 0
    %445 = vmatprep.subr.bf16.mxu0 0
    %446 = vmatpush2.bf16.msra.mxu0 0
    %447 = vmatprep.subr.bf16.mxu0 0
    %448 = vmatpush2.bf16.msra.mxu0 0
    %449 = vmatprep.subr.bf16.mxu0 0
    %450 = vmatpush2.bf16.msra.mxu0 0
    %451 = vmatprep.subr.bf16.mxu0 0
    %452 = vmatpush2.bf16.msra.mxu0 0
    %453 = vmatprep.subr.bf16.mxu0 0
    %454 = vmatpush2.bf16.msra.mxu0 0
    %455 = vmatprep.mubr.bf16.mxu0 0
    %456 = vmatmul.mubr.bf16.gmra.mxu0 %v350
    %v457 = vpop.f32.mrf.mxu0
    %v458 = vadd.f32 %v373, %v457
    %v459 = vpop.f32.mrf.mxu0
    %v460 = vpop.f32.mrf.mxu0
    %v461 = vadd.f32 %v373, %v460
    %v462 = vpop.f32.mrf.mxu0
    %463 = vmatprep.mubr.bf16.mxu0 0
    %464 = vmatmul.mubr.bf16.gmra.mxu0 %v351
    %v465 = vpop.f32.mrf.mxu0
    %v466 = vadd.f32 %v373, %v465
    %v467 = vpop.f32.mrf.mxu0
    %v468 = vpop.f32.mrf.mxu0
    %v469 = vpop.f32.mrf.mxu0
    %470 = vdwg.mxu0
    %v471 = vtanh.pop %v458
    %v472 = vtanh.pop %v461
    %v473 = vtanh.pop %v466
    %v474 = vld [vmem:[%s6] sm:$0x1]
    %v476 = vlaneseq
    %v477 = vshrl.u32 %v476, 7
    %v478 = vsub.s32 0, %v477
    %v479 = vrot.slane %v474, %v478
    %v481 = vmul.f32 %v471, %v479
    %v482 = vmul.f32 %v472, %v479
    %v483 = vmul.f32 %v473, %v479
    %v487 = vcombine.high %v481, %v481
    %v489 = vunpack.c.l.s4 1966171168
    %v490 = vunpack.c.0.s8 %v489
    %v491 = vlaneseq
    %v492 = vshrl.u32 %v491, 7
    %v493 = vsub.s32 %v490, %v492
    %v494 = vrot.slane %v481, %v493
    %v496 = vunpack.c.l.s4 1966171168
    %v497 = vunpack.c.0.s8 %v496
    %v498 = vlaneseq
    %v499 = vshrl.u32 %v498, 7
    %v500 = vsub.s32 %v497, %v499
    %v501 = vrot.slane %v487, %v500
    %v502 = vcombine.high %v494, %v494
    %v503 = vcombine.high %v501, %v501
    %v505 = vunpack.c.l.s4 1966171168
    %v506 = vunpack.c.0.s8 %v505
    %v507 = vlaneseq
    %v508 = vshrl.u32 %v507, 7
    %v509 = vsub.s32 %v506, %v508
    %v510 = vrot.slane %v494, %v509
    %v512 = vunpack.c.l.s4 1966171168
    %v513 = vunpack.c.0.s8 %v512
    %v514 = vlaneseq
    %v515 = vshrl.u32 %v514, 7
    %v516 = vsub.s32 %v513, %v515
    %v517 = vrot.slane %v501, %v516
    %v519 = vunpack.c.l.s4 1966171168
    %v520 = vunpack.c.0.s8 %v519
    %v521 = vlaneseq
    %v522 = vshrl.u32 %v521, 7
    %v523 = vsub.s32 %v520, %v522
    %v524 = vrot.slane %v502, %v523
    %v526 = vunpack.c.l.s4 1966171168
    %v527 = vunpack.c.0.s8 %v526
    %v528 = vlaneseq
    %v529 = vshrl.u32 %v528, 7
    %v530 = vsub.s32 %v527, %v529
    %v531 = vrot.slane %v503, %v530
    %v532 = vcombine.high %v510, %v510
    %v533 = vcombine.high %v517, %v517
    %v534 = vcombine.high %v524, %v524
    %v535 = vcombine.high %v531, %v531
    %v536 = vcombine.high %v482, %v482
    %v538 = vunpack.c.l.s4 1966171168
    %v539 = vunpack.c.0.s8 %v538
    %v540 = vlaneseq
    %v541 = vshrl.u32 %v540, 7
    %v542 = vsub.s32 %v539, %v541
    %v543 = vrot.slane %v482, %v542
    %v545 = vunpack.c.l.s4 1966171168
    %v546 = vunpack.c.0.s8 %v545
    %v547 = vlaneseq
    %v548 = vshrl.u32 %v547, 7
    %v549 = vsub.s32 %v546, %v548
    %v550 = vrot.slane %v536, %v549
    %v551 = vcombine.high %v543, %v543
    %v552 = vcombine.high %v550, %v550
    %v554 = vunpack.c.l.s4 1966171168
    %v555 = vunpack.c.0.s8 %v554
    %v556 = vlaneseq
    %v557 = vshrl.u32 %v556, 7
    %v558 = vsub.s32 %v555, %v557
    %v559 = vrot.slane %v543, %v558
    %v561 = vunpack.c.l.s4 1966171168
    %v562 = vunpack.c.0.s8 %v561
    %v563 = vlaneseq
    %v564 = vshrl.u32 %v563, 7
    %v565 = vsub.s32 %v562, %v564
    %v566 = vrot.slane %v550, %v565
    %v568 = vunpack.c.l.s4 1966171168
    %v569 = vunpack.c.0.s8 %v568
    %v570 = vlaneseq
    %v571 = vshrl.u32 %v570, 7
    %v572 = vsub.s32 %v569, %v571
    %v573 = vrot.slane %v551, %v572
    %v575 = vunpack.c.l.s4 1966171168
    %v576 = vunpack.c.0.s8 %v575
    %v577 = vlaneseq
    %v578 = vshrl.u32 %v577, 7
    %v579 = vsub.s32 %v576, %v578
    %v580 = vrot.slane %v552, %v579
    %v581 = vcombine.high %v559, %v559
    %v582 = vcombine.high %v566, %v566
    %v583 = vcombine.high %v573, %v573
    %v584 = vcombine.high %v580, %v580
    %v585 = vcombine.high %v483, %v483
    %v587 = vunpack.c.l.s4 1966171168
    %v588 = vunpack.c.0.s8 %v587
    %v589 = vlaneseq
    %v590 = vshrl.u32 %v589, 7
    %v591 = vsub.s32 %v588, %v590
    %v592 = vrot.slane %v483, %v591
    %v594 = vunpack.c.l.s4 1966171168
    %v595 = vunpack.c.0.s8 %v594
    %v596 = vlaneseq
    %v597 = vshrl.u32 %v596, 7
    %v598 = vsub.s32 %v595, %v597
    %v599 = vrot.slane %v585, %v598
    %v600 = vcombine.high %v592, %v592
    %v601 = vcombine.high %v599, %v599
    %v603 = vunpack.c.l.s4 1966171168
    %v604 = vunpack.c.0.s8 %v603
    %v605 = vlaneseq
    %v606 = vshrl.u32 %v605, 7
    %v607 = vsub.s32 %v604, %v606
    %v608 = vrot.slane %v592, %v607
    %v610 = vunpack.c.l.s4 1966171168
    %v611 = vunpack.c.0.s8 %v610
    %v612 = vlaneseq
    %v613 = vshrl.u32 %v612, 7
    %v614 = vsub.s32 %v611, %v613
    %v615 = vrot.slane %v599, %v614
    %v617 = vunpack.c.l.s4 1966171168
    %v618 = vunpack.c.0.s8 %v617
    %v619 = vlaneseq
    %v620 = vshrl.u32 %v619, 7
    %v621 = vsub.s32 %v618, %v620
    %v622 = vrot.slane %v600, %v621
    %v624 = vunpack.c.l.s4 1966171168
    %v625 = vunpack.c.0.s8 %v624
    %v626 = vlaneseq
    %v627 = vshrl.u32 %v626, 7
    %v628 = vsub.s32 %v625, %v627
    %v629 = vrot.slane %v601, %v628
    %v630 = vcombine.high %v608, %v608
    %v631 = vcombine.high %v615, %v615
    %v632 = vcombine.high %v622, %v622
    %v633 = vcombine.high %v629, %v629
    %v634 = vlaneseq
    %v635 = vshrl.u32 %v634, 7
    %v636 = vsub.s32 0, %v635
    %v637 = vrot.slane %v510, %v636
    %v638 = vlaneseq
    %v639 = vshrl.u32 %v638, 7
    %v640 = vsub.s32 0, %v639
    %v641 = vrot.slane %v524, %v640
    %v642 = vlaneseq
    %v643 = vshrl.u32 %v642, 7
    %v644 = vsub.s32 0, %v643
    %v645 = vrot.slane %v532, %v644
    %v646 = vlaneseq
    %v647 = vshrl.u32 %v646, 7
    %v648 = vsub.s32 0, %v647
    %v649 = vrot.slane %v534, %v648
    %v650 = vlaneseq
    %v651 = vshrl.u32 %v650, 7
    %v652 = vsub.s32 0, %v651
    %v653 = vrot.slane %v517, %v652
    %v654 = vlaneseq
    %v655 = vshrl.u32 %v654, 7
    %v656 = vsub.s32 0, %v655
    %v657 = vrot.slane %v531, %v656
    %v658 = vlaneseq
    %v659 = vshrl.u32 %v658, 7
    %v660 = vsub.s32 0, %v659
    %v661 = vrot.slane %v533, %v660
    %v662 = vlaneseq
    %v663 = vshrl.u32 %v662, 7
    %v664 = vsub.s32 0, %v663
    %v665 = vrot.slane %v535, %v664
    %v666 = vlaneseq
    %v667 = vshrl.u32 %v666, 7
    %v668 = vsub.s32 0, %v667
    %v669 = vrot.slane %v559, %v668
    %v670 = vlaneseq
    %v671 = vshrl.u32 %v670, 7
    %v672 = vsub.s32 0, %v671
    %v673 = vrot.slane %v573, %v672
    %v674 = vlaneseq
    %v675 = vshrl.u32 %v674, 7
    %v676 = vsub.s32 0, %v675
    %v677 = vrot.slane %v581, %v676
    %v678 = vlaneseq
    %v679 = vshrl.u32 %v678, 7
    %v680 = vsub.s32 0, %v679
    %v681 = vrot.slane %v583, %v680
    %v682 = vlaneseq
    %v683 = vshrl.u32 %v682, 7
    %v684 = vsub.s32 0, %v683
    %v685 = vrot.slane %v566, %v684
    %v686 = vlaneseq
    %v687 = vshrl.u32 %v686, 7
    %v688 = vsub.s32 0, %v687
    %v689 = vrot.slane %v580, %v688
    %v690 = vlaneseq
    %v691 = vshrl.u32 %v690, 7
    %v692 = vsub.s32 0, %v691
    %v693 = vrot.slane %v582, %v692
    %v694 = vlaneseq
    %v695 = vshrl.u32 %v694, 7
    %v696 = vsub.s32 0, %v695
    %v697 = vrot.slane %v584, %v696
    %v698 = vlaneseq
    %v699 = vshrl.u32 %v698, 7
    %v700 = vsub.s32 0, %v699
    %v701 = vrot.slane %v608, %v700
    %v702 = vlaneseq
    %v703 = vshrl.u32 %v702, 7
    %v704 = vsub.s32 0, %v703
    %v705 = vrot.slane %v622, %v704
    %v706 = vlaneseq
    %v707 = vshrl.u32 %v706, 7
    %v708 = vsub.s32 0, %v707
    %v709 = vrot.slane %v630, %v708
    %v710 = vlaneseq
    %v711 = vshrl.u32 %v710, 7
    %v712 = vsub.s32 0, %v711
    %v713 = vrot.slane %v632, %v712
    %v714 = vlaneseq
    %v715 = vshrl.u32 %v714, 7
    %v716 = vsub.s32 0, %v715
    %v717 = vrot.slane %v615, %v716
    %v718 = vlaneseq
    %v719 = vshrl.u32 %v718, 7
    %v720 = vsub.s32 0, %v719
    %v721 = vrot.slane %v629, %v720
    %v722 = vlaneseq
    %v723 = vshrl.u32 %v722, 7
    %v724 = vsub.s32 0, %v723
    %v725 = vrot.slane %v631, %v724
    %v726 = vlaneseq
    %v727 = vshrl.u32 %v726, 7
    %v728 = vsub.s32 0, %v727
    %v729 = vrot.slane %v633, %v728
    %v754 = vmul.f32 %v323, %v637
    %v755 = vmul.f32 %v324, %v641
    %v756 = vmul.f32 %v325, %v645
    %v757 = vmul.f32 %v326, %v649
    %v758 = vmul.f32 %v327, %v653
    %v759 = vmul.f32 %v328, %v657
    %v760 = vmul.f32 %v329, %v661
    %v761 = vmul.f32 %v330, %v665
    %v762 = vmul.f32 %v331, %v669
    %v763 = vmul.f32 %v332, %v673
    %v764 = vmul.f32 %v333, %v677
    %v765 = vmul.f32 %v334, %v681
    %v766 = vmul.f32 %v335, %v685
    %v767 = vmul.f32 %v336, %v689
    %v768 = vmul.f32 %v337, %v693
    %v769 = vmul.f32 %v338, %v697
    %v770 = vmul.f32 %v339, %v701
    %v771 = vmul.f32 %v340, %v705
    %v772 = vmul.f32 %v341, %v709
    %v773 = vmul.f32 %v342, %v713
    %v774 = vmul.f32 %v343, %v717
    %v775 = vmul.f32 %v344, %v721
    %v776 = vmul.f32 %v345, %v725
    %v777 = vmul.f32 %v346, %v729
    %778 = vadd.xlane.f32.xlu0 %v754
    %v779 = vpop.xlane.xlu0 %778
    %780 = vadd.xlane.f32.xlu0 %v755
    %v781 = vpop.xlane.xlu0 %780
    %782 = vadd.xlane.f32.xlu0 %v756
    %v783 = vpop.xlane.xlu0 %782
    %784 = vadd.xlane.f32.xlu0 %v757
    %v785 = vpop.xlane.xlu0 %784
    %786 = vadd.xlane.f32.xlu0 %v758
    %v787 = vpop.xlane.xlu0 %786
    %788 = vadd.xlane.f32.xlu0 %v759
    %v789 = vpop.xlane.xlu0 %788
    %790 = vadd.xlane.f32.xlu0 %v760
    %v791 = vpop.xlane.xlu0 %790
    %792 = vadd.xlane.f32.xlu0 %v761
    %v793 = vpop.xlane.xlu0 %792
    %794 = vadd.xlane.f32.xlu0 %v762
    %v795 = vpop.xlane.xlu0 %794
    %796 = vadd.xlane.f32.xlu0 %v763
    %v797 = vpop.xlane.xlu0 %796
    %798 = vadd.xlane.f32.xlu0 %v764
    %v799 = vpop.xlane.xlu0 %798
    %800 = vadd.xlane.f32.xlu0 %v765
    %v801 = vpop.xlane.xlu0 %800
    %802 = vadd.xlane.f32.xlu0 %v766
    %v803 = vpop.xlane.xlu0 %802
    %804 = vadd.xlane.f32.xlu0 %v767
    %v805 = vpop.xlane.xlu0 %804
    %806 = vadd.xlane.f32.xlu0 %v768
    %v807 = vpop.xlane.xlu0 %806
    %808 = vadd.xlane.f32.xlu0 %v769
    %v809 = vpop.xlane.xlu0 %808
    %810 = vadd.xlane.f32.xlu0 %v770
    %v811 = vpop.xlane.xlu0 %810
    %812 = vadd.xlane.f32.xlu0 %v771
    %v813 = vpop.xlane.xlu0 %812
    %814 = vadd.xlane.f32.xlu0 %v772
    %v815 = vpop.xlane.xlu0 %814
    %816 = vadd.xlane.f32.xlu0 %v773
    %v817 = vpop.xlane.xlu0 %816
    %818 = vadd.xlane.f32.xlu0 %v774
    %v819 = vpop.xlane.xlu0 %818
    %820 = vadd.xlane.f32.xlu0 %v775
    %v821 = vpop.xlane.xlu0 %820
    %822 = vadd.xlane.f32.xlu0 %v776
    %v823 = vpop.xlane.xlu0 %822
    %824 = vadd.xlane.f32.xlu0 %v777
    %v825 = vpop.xlane.xlu0 %824
    %s826 = sld [smem:[#allocation2]]
    %v827 = vstv %s826
    %v828 = vadd.f32 %v779, %v827
    %v829 = vadd.f32 %v781, %v827
    %v830 = vadd.f32 %v783, %v827
    %v831 = vadd.f32 %v785, %v827
    %v832 = vadd.f32 %v787, %v827
    %v833 = vadd.f32 %v789, %v827
    %v834 = vadd.f32 %v791, %v827
    %v835 = vadd.f32 %v793, %v827
    %v836 = vadd.f32 %v795, %v827
    %v837 = vadd.f32 %v797, %v827
    %v838 = vadd.f32 %v799, %v827
    %v839 = vadd.f32 %v801, %v827
    %v840 = vadd.f32 %v803, %v827
    %v841 = vadd.f32 %v805, %v827
    %v842 = vadd.f32 %v807, %v827
    %v843 = vadd.f32 %v809, %v827
    %v844 = vadd.f32 %v811, %v827
    %v845 = vadd.f32 %v813, %v827
    %v846 = vadd.f32 %v815, %v827
    %v847 = vadd.f32 %v817, %v827
    %v848 = vadd.f32 %v819, %v827
    %v849 = vadd.f32 %v821, %v827
    %v850 = vadd.f32 %v823, %v827
    %v851 = vadd.f32 %v825, %v827
    %v852 = vrot.slane %v828, 4
    %v853 = vmax.f32 %v828, %v852
    %v854 = vrot.slane %v853, 2
    %v855 = vmax.f32 %v853, %v854
    %v856 = vrot.slane %v855, 1
    %v857 = vmax.f32 %v855, %v856
    %v858 = vrot.slane %v829, 4
    %v859 = vmax.f32 %v829, %v858
    %v860 = vrot.slane %v859, 2
    %v861 = vmax.f32 %v859, %v860
    %v862 = vrot.slane %v861, 1
    %v863 = vmax.f32 %v861, %v862
    %v864 = vrot.slane %v830, 4
    %v865 = vmax.f32 %v830, %v864
    %v866 = vrot.slane %v865, 2
    %v867 = vmax.f32 %v865, %v866
    %v868 = vrot.slane %v867, 1
    %v869 = vmax.f32 %v867, %v868
    %v870 = vrot.slane %v831, 4
    %v871 = vmax.f32 %v831, %v870
    %v872 = vrot.slane %v871, 2
    %v873 = vmax.f32 %v871, %v872
    %v874 = vrot.slane %v873, 1
    %v875 = vmax.f32 %v873, %v874
    %v876 = vrot.slane %v832, 4
    %v877 = vmax.f32 %v832, %v876
    %v878 = vrot.slane %v877, 2
    %v879 = vmax.f32 %v877, %v878
    %v880 = vrot.slane %v879, 1
    %v881 = vmax.f32 %v879, %v880
    %v882 = vrot.slane %v833, 4
    %v883 = vmax.f32 %v833, %v882
    %v884 = vrot.slane %v883, 2
    %v885 = vmax.f32 %v883, %v884
    %v886 = vrot.slane %v885, 1
    %v887 = vmax.f32 %v885, %v886
    %v888 = vrot.slane %v834, 4
    %v889 = vmax.f32 %v834, %v888
    %v890 = vrot.slane %v889, 2
    %v891 = vmax.f32 %v889, %v890
    %v892 = vrot.slane %v891, 1
    %v893 = vmax.f32 %v891, %v892
    %v894 = vrot.slane %v835, 4
    %v895 = vmax.f32 %v835, %v894
    %v896 = vrot.slane %v895, 2
    %v897 = vmax.f32 %v895, %v896
    %v898 = vrot.slane %v897, 1
    %v899 = vmax.f32 %v897, %v898
    %v900 = vrot.slane %v836, 4
    %v901 = vmax.f32 %v836, %v900
    %v902 = vrot.slane %v901, 2
    %v903 = vmax.f32 %v901, %v902
    %v904 = vrot.slane %v903, 1
    %v905 = vmax.f32 %v903, %v904
    %v906 = vrot.slane %v837, 4
    %v907 = vmax.f32 %v837, %v906
    %v908 = vrot.slane %v907, 2
    %v909 = vmax.f32 %v907, %v908
    %v910 = vrot.slane %v909, 1
    %v911 = vmax.f32 %v909, %v910
    %v912 = vrot.slane %v838, 4
    %v913 = vmax.f32 %v838, %v912
    %v914 = vrot.slane %v913, 2
    %v915 = vmax.f32 %v913, %v914
    %v916 = vrot.slane %v915, 1
    %v917 = vmax.f32 %v915, %v916
    %v918 = vrot.slane %v839, 4
    %v919 = vmax.f32 %v839, %v918
    %v920 = vrot.slane %v919, 2
    %v921 = vmax.f32 %v919, %v920
    %v922 = vrot.slane %v921, 1
    %v923 = vmax.f32 %v921, %v922
    %v924 = vrot.slane %v840, 4
    %v925 = vmax.f32 %v840, %v924
    %v926 = vrot.slane %v925, 2
    %v927 = vmax.f32 %v925, %v926
    %v928 = vrot.slane %v927, 1
    %v929 = vmax.f32 %v927, %v928
    %v930 = vrot.slane %v841, 4
    %v931 = vmax.f32 %v841, %v930
    %v932 = vrot.slane %v931, 2
    %v933 = vmax.f32 %v931, %v932
    %v934 = vrot.slane %v933, 1
    %v935 = vmax.f32 %v933, %v934
    %v936 = vrot.slane %v842, 4
    %v937 = vmax.f32 %v842, %v936
    %v938 = vrot.slane %v937, 2
    %v939 = vmax.f32 %v937, %v938
    %v940 = vrot.slane %v939, 1
    %v941 = vmax.f32 %v939, %v940
    %v942 = vrot.slane %v843, 4
    %v943 = vmax.f32 %v843, %v942
    %v944 = vrot.slane %v943, 2
    %v945 = vmax.f32 %v943, %v944
    %v946 = vrot.slane %v945, 1
    %v947 = vmax.f32 %v945, %v946
    %v948 = vrot.slane %v844, 4
    %v949 = vmax.f32 %v844, %v948
    %v950 = vrot.slane %v949, 2
    %v951 = vmax.f32 %v949, %v950
    %v952 = vrot.slane %v951, 1
    %v953 = vmax.f32 %v951, %v952
    %v954 = vrot.slane %v845, 4
    %v955 = vmax.f32 %v845, %v954
    %v956 = vrot.slane %v955, 2
    %v957 = vmax.f32 %v955, %v956
    %v958 = vrot.slane %v957, 1
    %v959 = vmax.f32 %v957, %v958
    %v960 = vrot.slane %v846, 4
    %v961 = vmax.f32 %v846, %v960
    %v962 = vrot.slane %v961, 2
    %v963 = vmax.f32 %v961, %v962
    %v964 = vrot.slane %v963, 1
    %v965 = vmax.f32 %v963, %v964
    %v966 = vrot.slane %v847, 4
    %v967 = vmax.f32 %v847, %v966
    %v968 = vrot.slane %v967, 2
    %v969 = vmax.f32 %v967, %v968
    %v970 = vrot.slane %v969, 1
    %v971 = vmax.f32 %v969, %v970
    %v972 = vrot.slane %v848, 4
    %v973 = vmax.f32 %v848, %v972
    %v974 = vrot.slane %v973, 2
    %v975 = vmax.f32 %v973, %v974
    %v976 = vrot.slane %v975, 1
    %v977 = vmax.f32 %v975, %v976
    %v978 = vrot.slane %v849, 4
    %v979 = vmax.f32 %v849, %v978
    %v980 = vrot.slane %v979, 2
    %v981 = vmax.f32 %v979, %v980
    %v982 = vrot.slane %v981, 1
    %v983 = vmax.f32 %v981, %v982
    %v984 = vrot.slane %v850, 4
    %v985 = vmax.f32 %v850, %v984
    %v986 = vrot.slane %v985, 2
    %v987 = vmax.f32 %v985, %v986
    %v988 = vrot.slane %v987, 1
    %v989 = vmax.f32 %v987, %v988
    %v990 = vrot.slane %v851, 4
    %v991 = vmax.f32 %v851, %v990
    %v992 = vrot.slane %v991, 2
    %v993 = vmax.f32 %v991, %v992
    %v994 = vrot.slane %v993, 1
    %v995 = vmax.f32 %v993, %v994
    %v996 = vsub.f32 %v828, %v857
    %v997 = vsub.f32 %v829, %v863
    %v998 = vsub.f32 %v830, %v869
    %v999 = vsub.f32 %v831, %v875
    %v1000 = vsub.f32 %v832, %v881
    %v1001 = vsub.f32 %v833, %v887
    %v1002 = vsub.f32 %v834, %v893
    %v1003 = vsub.f32 %v835, %v899
    %v1004 = vsub.f32 %v836, %v905
    %v1005 = vsub.f32 %v837, %v911
    %v1006 = vsub.f32 %v838, %v917
    %v1007 = vsub.f32 %v839, %v923
    %v1008 = vsub.f32 %v840, %v929
    %v1009 = vsub.f32 %v841, %v935
    %v1010 = vsub.f32 %v842, %v941
    %v1011 = vsub.f32 %v843, %v947
    %v1012 = vsub.f32 %v844, %v953
    %v1013 = vsub.f32 %v845, %v959
    %v1014 = vsub.f32 %v846, %v965
    %v1015 = vsub.f32 %v847, %v971
    %v1016 = vsub.f32 %v848, %v977
    %v1017 = vsub.f32 %v849, %v983
    %v1018 = vsub.f32 %v850, %v989
    %v1019 = vsub.f32 %v851, %v995
    %v1020 = vmul.f32 %v996, 1.442695
    %v1021 = vpow.pop %v1020
    %v1022 = vmul.f32 %v997, 1.442695
    %v1023 = vpow.pop %v1022
    %v1024 = vmul.f32 %v998, 1.442695
    %v1025 = vpow.pop %v1024
    %v1026 = vmul.f32 %v999, 1.442695
    %v1027 = vpow.pop %v1026
    %v1028 = vmul.f32 %v1000, 1.442695
    %v1029 = vpow.pop %v1028
    %v1030 = vmul.f32 %v1001, 1.442695
    %v1031 = vpow.pop %v1030
    %v1032 = vmul.f32 %v1002, 1.442695
    %v1033 = vpow.pop %v1032
    %v1034 = vmul.f32 %v1003, 1.442695
    %v1035 = vpow.pop %v1034
    %v1036 = vmul.f32 %v1004, 1.442695
    %v1037 = vpow.pop %v1036
    %v1038 = vmul.f32 %v1005, 1.442695
    %v1039 = vpow.pop %v1038
    %v1040 = vmul.f32 %v1006, 1.442695
    %v1041 = vpow.pop %v1040
    %v1042 = vmul.f32 %v1007, 1.442695
    %v1043 = vpow.pop %v1042
    %v1044 = vmul.f32 %v1008, 1.442695
    %v1045 = vpow.pop %v1044
    %v1046 = vmul.f32 %v1009, 1.442695
    %v1047 = vpow.pop %v1046
    %v1048 = vmul.f32 %v1010, 1.442695
    %v1049 = vpow.pop %v1048
    %v1050 = vmul.f32 %v1011, 1.442695
    %v1051 = vpow.pop %v1050
    %v1052 = vmul.f32 %v1012, 1.442695
    %v1053 = vpow.pop %v1052
    %v1054 = vmul.f32 %v1013, 1.442695
    %v1055 = vpow.pop %v1054
    %v1056 = vmul.f32 %v1014, 1.442695
    %v1057 = vpow.pop %v1056
    %v1058 = vmul.f32 %v1015, 1.442695
    %v1059 = vpow.pop %v1058
    %v1060 = vmul.f32 %v1016, 1.442695
    %v1061 = vpow.pop %v1060
    %v1062 = vmul.f32 %v1017, 1.442695
    %v1063 = vpow.pop %v1062
    %v1064 = vmul.f32 %v1018, 1.442695
    %v1065 = vpow.pop %v1064
    %v1066 = vmul.f32 %v1019, 1.442695
    %v1067 = vpow.pop %v1066
    %v1068 = vrot.slane %v1021, 4
    %v1069 = vadd.f32 %v1021, %v1068
    %v1070 = vrot.slane %v1069, 2
    %v1071 = vadd.f32 %v1069, %v1070
    %v1072 = vrot.slane %v1071, 1
    %v1073 = vadd.f32 %v1071, %v1072
    %v1074 = vrot.slane %v1023, 4
    %v1075 = vadd.f32 %v1023, %v1074
    %v1076 = vrot.slane %v1075, 2
    %v1077 = vadd.f32 %v1075, %v1076
    %v1078 = vrot.slane %v1077, 1
    %v1079 = vadd.f32 %v1077, %v1078
    %v1080 = vrot.slane %v1025, 4
    %v1081 = vadd.f32 %v1025, %v1080
    %v1082 = vrot.slane %v1081, 2
    %v1083 = vadd.f32 %v1081, %v1082
    %v1084 = vrot.slane %v1083, 1
    %v1085 = vadd.f32 %v1083, %v1084
    %v1086 = vrot.slane %v1027, 4
    %v1087 = vadd.f32 %v1027, %v1086
    %v1088 = vrot.slane %v1087, 2
    %v1089 = vadd.f32 %v1087, %v1088
    %v1090 = vrot.slane %v1089, 1
    %v1091 = vadd.f32 %v1089, %v1090
    %v1092 = vrot.slane %v1029, 4
    %v1093 = vadd.f32 %v1029, %v1092
    %v1094 = vrot.slane %v1093, 2
    %v1095 = vadd.f32 %v1093, %v1094
    %v1096 = vrot.slane %v1095, 1
    %v1097 = vadd.f32 %v1095, %v1096
    %v1098 = vrot.slane %v1031, 4
    %v1099 = vadd.f32 %v1031, %v1098
    %v1100 = vrot.slane %v1099, 2
    %v1101 = vadd.f32 %v1099, %v1100
    %v1102 = vrot.slane %v1101, 1
    %v1103 = vadd.f32 %v1101, %v1102
    %v1104 = vrot.slane %v1033, 4
    %v1105 = vadd.f32 %v1033, %v1104
    %v1106 = vrot.slane %v1105, 2
    %v1107 = vadd.f32 %v1105, %v1106
    %v1108 = vrot.slane %v1107, 1
    %v1109 = vadd.f32 %v1107, %v1108
    %v1110 = vrot.slane %v1035, 4
    %v1111 = vadd.f32 %v1035, %v1110
    %v1112 = vrot.slane %v1111, 2
    %v1113 = vadd.f32 %v1111, %v1112
    %v1114 = vrot.slane %v1113, 1
    %v1115 = vadd.f32 %v1113, %v1114
    %v1116 = vrot.slane %v1037, 4
    %v1117 = vadd.f32 %v1037, %v1116
    %v1118 = vrot.slane %v1117, 2
    %v1119 = vadd.f32 %v1117, %v1118
    %v1120 = vrot.slane %v1119, 1
    %v1121 = vadd.f32 %v1119, %v1120
    %v1122 = vrot.slane %v1039, 4
    %v1123 = vadd.f32 %v1039, %v1122
    %v1124 = vrot.slane %v1123, 2
    %v1125 = vadd.f32 %v1123, %v1124
    %v1126 = vrot.slane %v1125, 1
    %v1127 = vadd.f32 %v1125, %v1126
    %v1128 = vrot.slane %v1041, 4
    %v1129 = vadd.f32 %v1041, %v1128
    %v1130 = vrot.slane %v1129, 2
    %v1131 = vadd.f32 %v1129, %v1130
    %v1132 = vrot.slane %v1131, 1
    %v1133 = vadd.f32 %v1131, %v1132
    %v1134 = vrot.slane %v1043, 4
    %v1135 = vadd.f32 %v1043, %v1134
    %v1136 = vrot.slane %v1135, 2
    %v1137 = vadd.f32 %v1135, %v1136
    %v1138 = vrot.slane %v1137, 1
    %v1139 = vadd.f32 %v1137, %v1138
    %v1140 = vrot.slane %v1045, 4
    %v1141 = vadd.f32 %v1045, %v1140
    %v1142 = vrot.slane %v1141, 2
    %v1143 = vadd.f32 %v1141, %v1142
    %v1144 = vrot.slane %v1143, 1
    %v1145 = vadd.f32 %v1143, %v1144
    %v1146 = vrot.slane %v1047, 4
    %v1147 = vadd.f32 %v1047, %v1146
    %v1148 = vrot.slane %v1147, 2
    %v1149 = vadd.f32 %v1147, %v1148
    %v1150 = vrot.slane %v1149, 1
    %v1151 = vadd.f32 %v1149, %v1150
    %v1152 = vrot.slane %v1049, 4
    %v1153 = vadd.f32 %v1049, %v1152
    %v1154 = vrot.slane %v1153, 2
    %v1155 = vadd.f32 %v1153, %v1154
    %v1156 = vrot.slane %v1155, 1
    %v1157 = vadd.f32 %v1155, %v1156
    %v1158 = vrot.slane %v1051, 4
    %v1159 = vadd.f32 %v1051, %v1158
    %v1160 = vrot.slane %v1159, 2
    %v1161 = vadd.f32 %v1159, %v1160
    %v1162 = vrot.slane %v1161, 1
    %v1163 = vadd.f32 %v1161, %v1162
    %v1164 = vrot.slane %v1053, 4
    %v1165 = vadd.f32 %v1053, %v1164
    %v1166 = vrot.slane %v1165, 2
    %v1167 = vadd.f32 %v1165, %v1166
    %v1168 = vrot.slane %v1167, 1
    %v1169 = vadd.f32 %v1167, %v1168
    %v1170 = vrot.slane %v1055, 4
    %v1171 = vadd.f32 %v1055, %v1170
    %v1172 = vrot.slane %v1171, 2
    %v1173 = vadd.f32 %v1171, %v1172
    %v1174 = vrot.slane %v1173, 1
    %v1175 = vadd.f32 %v1173, %v1174
    %v1176 = vrot.slane %v1057, 4
    %v1177 = vadd.f32 %v1057, %v1176
    %v1178 = vrot.slane %v1177, 2
    %v1179 = vadd.f32 %v1177, %v1178
    %v1180 = vrot.slane %v1179, 1
    %v1181 = vadd.f32 %v1179, %v1180
    %v1182 = vrot.slane %v1059, 4
    %v1183 = vadd.f32 %v1059, %v1182
    %v1184 = vrot.slane %v1183, 2
    %v1185 = vadd.f32 %v1183, %v1184
    %v1186 = vrot.slane %v1185, 1
    %v1187 = vadd.f32 %v1185, %v1186
    %v1188 = vrot.slane %v1061, 4
    %v1189 = vadd.f32 %v1061, %v1188
    %v1190 = vrot.slane %v1189, 2
    %v1191 = vadd.f32 %v1189, %v1190
    %v1192 = vrot.slane %v1191, 1
    %v1193 = vadd.f32 %v1191, %v1192
    %v1194 = vrot.slane %v1063, 4
    %v1195 = vadd.f32 %v1063, %v1194
    %v1196 = vrot.slane %v1195, 2
    %v1197 = vadd.f32 %v1195, %v1196
    %v1198 = vrot.slane %v1197, 1
    %v1199 = vadd.f32 %v1197, %v1198
    %v1200 = vrot.slane %v1065, 4
    %v1201 = vadd.f32 %v1065, %v1200
    %v1202 = vrot.slane %v1201, 2
    %v1203 = vadd.f32 %v1201, %v1202
    %v1204 = vrot.slane %v1203, 1
    %v1205 = vadd.f32 %v1203, %v1204
    %v1206 = vrot.slane %v1067, 4
    %v1207 = vadd.f32 %v1067, %v1206
    %v1208 = vrot.slane %v1207, 2
    %v1209 = vadd.f32 %v1207, %v1208
    %v1210 = vrot.slane %v1209, 1
    %v1211 = vadd.f32 %v1209, %v1210
    %v1212 = vrcp.pop %v1073
    %v1213 = vrcp.pop %v1079
    %v1214 = vrcp.pop %v1085
    %v1215 = vrcp.pop %v1091
    %v1216 = vrcp.pop %v1097
    %v1217 = vrcp.pop %v1103
    %v1218 = vrcp.pop %v1109
    %v1219 = vrcp.pop %v1115
    %v1220 = vrcp.pop %v1121
    %v1221 = vrcp.pop %v1127
    %v1222 = vrcp.pop %v1133
    %v1223 = vrcp.pop %v1139
    %v1224 = vrcp.pop %v1145
    %v1225 = vrcp.pop %v1151
    %v1226 = vrcp.pop %v1157
    %v1227 = vrcp.pop %v1163
    %v1228 = vrcp.pop %v1169
    %v1229 = vrcp.pop %v1175
    %v1230 = vrcp.pop %v1181
    %v1231 = vrcp.pop %v1187
    %v1232 = vrcp.pop %v1193
    %v1233 = vrcp.pop %v1199
    %v1234 = vrcp.pop %v1205
    %v1235 = vrcp.pop %v1211
    %v1236 = vmul.f32 %v1021, %v1212
    %v1237 = vmul.f32 %v1023, %v1213
    %v1238 = vmul.f32 %v1025, %v1214
    %v1239 = vmul.f32 %v1027, %v1215
    %v1240 = vmul.f32 %v1029, %v1216
    %v1241 = vmul.f32 %v1031, %v1217
    %v1242 = vmul.f32 %v1033, %v1218
    %v1243 = vmul.f32 %v1035, %v1219
    %v1244 = vmul.f32 %v1037, %v1220
    %v1245 = vmul.f32 %v1039, %v1221
    %v1246 = vmul.f32 %v1041, %v1222
    %v1247 = vmul.f32 %v1043, %v1223
    %v1248 = vmul.f32 %v1045, %v1224
    %v1249 = vmul.f32 %v1047, %v1225
    %v1250 = vmul.f32 %v1049, %v1226
    %v1251 = vmul.f32 %v1051, %v1227
    %v1252 = vmul.f32 %v1053, %v1228
    %v1253 = vmul.f32 %v1055, %v1229
    %v1254 = vmul.f32 %v1057, %v1230
    %v1255 = vmul.f32 %v1059, %v1231
    %v1256 = vmul.f32 %v1061, %v1232
    %v1257 = vmul.f32 %v1063, %v1233
    %v1258 = vmul.f32 %v1065, %v1234
    %v1259 = vmul.f32 %v1067, %v1235
    %v1260 = vmul.f32 %v1236, %v87
    %v1261 = vmul.f32 %v1237, %v88
    %v1262 = vmul.f32 %v1238, %v89
    %v1263 = vmul.f32 %v1239, %v90
    %v1264 = vmul.f32 %v1240, %v91
    %v1265 = vmul.f32 %v1241, %v92
    %v1266 = vmul.f32 %v1242, %v93
    %v1267 = vmul.f32 %v1243, %v94
    %v1268 = vmul.f32 %v1244, %v95
    %v1269 = vmul.f32 %v1245, %v96
    %v1270 = vmul.f32 %v1246, %v97
    %v1271 = vmul.f32 %v1247, %v98
    %v1272 = vmul.f32 %v1248, %v99
    %v1273 = vmul.f32 %v1249, %v100
    %v1274 = vmul.f32 %v1250, %v101
    %v1275 = vmul.f32 %v1251, %v102
    %v1276 = vmul.f32 %v1252, %v103
    %v1277 = vmul.f32 %v1253, %v104
    %v1278 = vmul.f32 %v1254, %v105
    %v1279 = vmul.f32 %v1255, %v106
    %v1280 = vmul.f32 %v1256, %v107
    %v1281 = vmul.f32 %v1257, %v108
    %v1282 = vmul.f32 %v1258, %v109
    %v1283 = vmul.f32 %v1259, %v110
    %v1284 = vrot.slane %v1260, 4
    %v1285 = vadd.f32 %v1260, %v1284
    %v1286 = vrot.slane %v1285, 2
    %v1287 = vadd.f32 %v1285, %v1286
    %v1288 = vrot.slane %v1287, 1
    %v1289 = vadd.f32 %v1287, %v1288
    %v1290 = vrot.slane %v1261, 4
    %v1291 = vadd.f32 %v1261, %v1290
    %v1292 = vrot.slane %v1291, 2
    %v1293 = vadd.f32 %v1291, %v1292
    %v1294 = vrot.slane %v1293, 1
    %v1295 = vadd.f32 %v1293, %v1294
    %v1296 = vrot.slane %v1262, 4
    %v1297 = vadd.f32 %v1262, %v1296
    %v1298 = vrot.slane %v1297, 2
    %v1299 = vadd.f32 %v1297, %v1298
    %v1300 = vrot.slane %v1299, 1
    %v1301 = vadd.f32 %v1299, %v1300
    %v1302 = vrot.slane %v1263, 4
    %v1303 = vadd.f32 %v1263, %v1302
    %v1304 = vrot.slane %v1303, 2
    %v1305 = vadd.f32 %v1303, %v1304
    %v1306 = vrot.slane %v1305, 1
    %v1307 = vadd.f32 %v1305, %v1306
    %v1308 = vrot.slane %v1264, 4
    %v1309 = vadd.f32 %v1264, %v1308
    %v1310 = vrot.slane %v1309, 2
    %v1311 = vadd.f32 %v1309, %v1310
    %v1312 = vrot.slane %v1311, 1
    %v1313 = vadd.f32 %v1311, %v1312
    %v1314 = vrot.slane %v1265, 4
    %v1315 = vadd.f32 %v1265, %v1314
    %v1316 = vrot.slane %v1315, 2
    %v1317 = vadd.f32 %v1315, %v1316
    %v1318 = vrot.slane %v1317, 1
    %v1319 = vadd.f32 %v1317, %v1318
    %v1320 = vrot.slane %v1266, 4
    %v1321 = vadd.f32 %v1266, %v1320
    %v1322 = vrot.slane %v1321, 2
    %v1323 = vadd.f32 %v1321, %v1322
    %v1324 = vrot.slane %v1323, 1
    %v1325 = vadd.f32 %v1323, %v1324
    %v1326 = vrot.slane %v1267, 4
    %v1327 = vadd.f32 %v1267, %v1326
    %v1328 = vrot.slane %v1327, 2
    %v1329 = vadd.f32 %v1327, %v1328
    %v1330 = vrot.slane %v1329, 1
    %v1331 = vadd.f32 %v1329, %v1330
    %v1332 = vrot.slane %v1268, 4
    %v1333 = vadd.f32 %v1268, %v1332
    %v1334 = vrot.slane %v1333, 2
    %v1335 = vadd.f32 %v1333, %v1334
    %v1336 = vrot.slane %v1335, 1
    %v1337 = vadd.f32 %v1335, %v1336
    %v1338 = vrot.slane %v1269, 4
    %v1339 = vadd.f32 %v1269, %v1338
    %v1340 = vrot.slane %v1339, 2
    %v1341 = vadd.f32 %v1339, %v1340
    %v1342 = vrot.slane %v1341, 1
    %v1343 = vadd.f32 %v1341, %v1342
    %v1344 = vrot.slane %v1270, 4
    %v1345 = vadd.f32 %v1270, %v1344
    %v1346 = vrot.slane %v1345, 2
    %v1347 = vadd.f32 %v1345, %v1346
    %v1348 = vrot.slane %v1347, 1
    %v1349 = vadd.f32 %v1347, %v1348
    %v1350 = vrot.slane %v1271, 4
    %v1351 = vadd.f32 %v1271, %v1350
    %v1352 = vrot.slane %v1351, 2
    %v1353 = vadd.f32 %v1351, %v1352
    %v1354 = vrot.slane %v1353, 1
    %v1355 = vadd.f32 %v1353, %v1354
    %v1356 = vrot.slane %v1272, 4
    %v1357 = vadd.f32 %v1272, %v1356
    %v1358 = vrot.slane %v1357, 2
    %v1359 = vadd.f32 %v1357, %v1358
    %v1360 = vrot.slane %v1359, 1
    %v1361 = vadd.f32 %v1359, %v1360
    %v1362 = vrot.slane %v1273, 4
    %v1363 = vadd.f32 %v1273, %v1362
    %v1364 = vrot.slane %v1363, 2
    %v1365 = vadd.f32 %v1363, %v1364
    %v1366 = vrot.slane %v1365, 1
    %v1367 = vadd.f32 %v1365, %v1366
    %v1368 = vrot.slane %v1274, 4
    %v1369 = vadd.f32 %v1274, %v1368
    %v1370 = vrot.slane %v1369, 2
    %v1371 = vadd.f32 %v1369, %v1370
    %v1372 = vrot.slane %v1371, 1
    %v1373 = vadd.f32 %v1371, %v1372
    %v1374 = vrot.slane %v1275, 4
    %v1375 = vadd.f32 %v1275, %v1374
    %v1376 = vrot.slane %v1375, 2
    %v1377 = vadd.f32 %v1375, %v1376
    %v1378 = vrot.slane %v1377, 1
    %v1379 = vadd.f32 %v1377, %v1378
    %v1380 = vrot.slane %v1276, 4
    %v1381 = vadd.f32 %v1276, %v1380
    %v1382 = vrot.slane %v1381, 2
    %v1383 = vadd.f32 %v1381, %v1382
    %v1384 = vrot.slane %v1383, 1
    %v1385 = vadd.f32 %v1383, %v1384
    %v1386 = vrot.slane %v1277, 4
    %v1387 = vadd.f32 %v1277, %v1386
    %v1388 = vrot.slane %v1387, 2
    %v1389 = vadd.f32 %v1387, %v1388
    %v1390 = vrot.slane %v1389, 1
    %v1391 = vadd.f32 %v1389, %v1390
    %v1392 = vrot.slane %v1278, 4
    %v1393 = vadd.f32 %v1278, %v1392
    %v1394 = vrot.slane %v1393, 2
    %v1395 = vadd.f32 %v1393, %v1394
    %v1396 = vrot.slane %v1395, 1
    %v1397 = vadd.f32 %v1395, %v1396
    %v1398 = vrot.slane %v1279, 4
    %v1399 = vadd.f32 %v1279, %v1398
    %v1400 = vrot.slane %v1399, 2
    %v1401 = vadd.f32 %v1399, %v1400
    %v1402 = vrot.slane %v1401, 1
    %v1403 = vadd.f32 %v1401, %v1402
    %v1404 = vrot.slane %v1280, 4
    %v1405 = vadd.f32 %v1280, %v1404
    %v1406 = vrot.slane %v1405, 2
    %v1407 = vadd.f32 %v1405, %v1406
    %v1408 = vrot.slane %v1407, 1
    %v1409 = vadd.f32 %v1407, %v1408
    %v1410 = vrot.slane %v1281, 4
    %v1411 = vadd.f32 %v1281, %v1410
    %v1412 = vrot.slane %v1411, 2
    %v1413 = vadd.f32 %v1411, %v1412
    %v1414 = vrot.slane %v1413, 1
    %v1415 = vadd.f32 %v1413, %v1414
    %v1416 = vrot.slane %v1282, 4
    %v1417 = vadd.f32 %v1282, %v1416
    %v1418 = vrot.slane %v1417, 2
    %v1419 = vadd.f32 %v1417, %v1418
    %v1420 = vrot.slane %v1419, 1
    %v1421 = vadd.f32 %v1419, %v1420
    %v1422 = vrot.slane %v1283, 4
    %v1423 = vadd.f32 %v1283, %v1422
    %v1424 = vrot.slane %v1423, 2
    %v1425 = vadd.f32 %v1423, %v1424
    %v1426 = vrot.slane %v1425, 1
    %v1427 = vadd.f32 %v1425, %v1426
    %v1428 = vmul.f32 %v1289, %v1289
    %v1429 = vmul.f32 %v1295, %v1295
    %v1430 = vmul.f32 %v1301, %v1301
    %v1431 = vmul.f32 %v1307, %v1307
    %v1432 = vmul.f32 %v1313, %v1313
    %v1433 = vmul.f32 %v1319, %v1319
    %v1434 = vmul.f32 %v1325, %v1325
    %v1435 = vmul.f32 %v1331, %v1331
    %v1436 = vmul.f32 %v1337, %v1337
    %v1437 = vmul.f32 %v1343, %v1343
    %v1438 = vmul.f32 %v1349, %v1349
    %v1439 = vmul.f32 %v1355, %v1355
    %v1440 = vmul.f32 %v1361, %v1361
    %v1441 = vmul.f32 %v1367, %v1367
    %v1442 = vmul.f32 %v1373, %v1373
    %v1443 = vmul.f32 %v1379, %v1379
    %v1444 = vmul.f32 %v1385, %v1385
    %v1445 = vmul.f32 %v1391, %v1391
    %v1446 = vmul.f32 %v1397, %v1397
    %v1447 = vmul.f32 %v1403, %v1403
    %v1448 = vmul.f32 %v1409, %v1409
    %v1449 = vmul.f32 %v1415, %v1415
    %v1450 = vmul.f32 %v1421, %v1421
    %v1451 = vmul.f32 %v1427, %v1427
    %vm1476 = vcmask 1041409
    %v1477 = vsel %vm1476, %v1429, %v1428
    %vm1478 = vcmask 1042434
    %v1479 = vsel %vm1478, %v1430, %v1477
    %vm1480 = vcmask 1043459
    %v1481 = vsel %vm1480, %v1431, %v1479
    %vm1482 = vcmask 1044484
    %v1483 = vsel %vm1482, %v1432, %v1481
    %vm1484 = vcmask 1045509
    %v1485 = vsel %vm1484, %v1433, %v1483
    %vm1486 = vcmask 1046534
    %v1487 = vsel %vm1486, %v1434, %v1485
    %vm1488 = vcmask 1047559
    %v1489 = vsel %vm1488, %v1435, %v1487
    %v1490 = vsel %vm1476, %v1437, %v1436
    %v1491 = vsel %vm1478, %v1438, %v1490
    %v1492 = vsel %vm1480, %v1439, %v1491
    %v1493 = vsel %vm1482, %v1440, %v1492
    %v1494 = vsel %vm1484, %v1441, %v1493
    %v1495 = vsel %vm1486, %v1442, %v1494
    %v1496 = vsel %vm1488, %v1443, %v1495
    %v1497 = vsel %vm1476, %v1445, %v1444
    %v1498 = vsel %vm1478, %v1446, %v1497
    %v1499 = vsel %vm1480, %v1447, %v1498
    %v1500 = vsel %vm1482, %v1448, %v1499
    %v1501 = vsel %vm1484, %v1449, %v1500
    %v1502 = vsel %vm1486, %v1450, %v1501
    %v1503 = vsel %vm1488, %v1451, %v1502
    %1507 = vadd.xlane.f32.xlu0 %v1489
    %v1508 = vpop.xlane.xlu0 %1507
    %1509 = vadd.xlane.f32.xlu0 %v1496
    %v1510 = vpop.xlane.xlu0 %1509
    %1511 = vadd.xlane.f32.xlu0 %v1503
    %v1512 = vpop.xlane.xlu0 %1511
    %v1513 = vrsqrt.pop %v1508
    %v1514 = vmul.f32 %v1508, %v1513
    %vm1515 = vcmp.eq.f32.partialorder %v1508, inf
    %v1516 = vsel %vm1515, %v1508, %v1514
    %vm1517 = vcmp.eq.f32.partialorder %v1508, 0.0
    %v1518 = vand.u32 %v1508, 2147483648
    %v1519 = vsel %vm1517, %v1518, %v1516
    %v1520 = vrsqrt.pop %v1510
    %v1521 = vmul.f32 %v1510, %v1520
    %vm1522 = vcmp.eq.f32.partialorder %v1510, inf
    %v1523 = vsel %vm1522, %v1510, %v1521
    %vm1524 = vcmp.eq.f32.partialorder %v1510, 0.0
    %v1525 = vand.u32 %v1510, 2147483648
    %v1526 = vsel %vm1524, %v1525, %v1523
    %v1527 = vrsqrt.pop %v1512
    %v1528 = vmul.f32 %v1512, %v1527
    %vm1529 = vcmp.eq.f32.partialorder %v1512, inf
    %v1530 = vsel %vm1529, %v1512, %v1528
    %vm1531 = vcmp.eq.f32.partialorder %v1512, 0.0
    %v1532 = vand.u32 %v1512, 2147483648
    %v1533 = vsel %vm1531, %v1532, %v1530
    %v1534 = vadd.f32 %v1519, 1e-08
    %v1535 = vadd.f32 %v1526, 1e-08
    %v1536 = vadd.f32 %v1533, 1e-08
    %v1540 = vrot.slane %v1534, 1
    %v1541 = vrot.slane %v1534, 2
    %v1542 = vrot.slane %v1534, 3
    %v1543 = vrot.slane %v1534, 4
    %v1544 = vrot.slane %v1534, 5
    %v1545 = vrot.slane %v1534, 6
    %v1546 = vrot.slane %v1534, 7
    %v1547 = vrot.slane %v1535, 1
    %v1548 = vrot.slane %v1535, 2
    %v1549 = vrot.slane %v1535, 3
    %v1550 = vrot.slane %v1535, 4
    %v1551 = vrot.slane %v1535, 5
    %v1552 = vrot.slane %v1535, 6
    %v1553 = vrot.slane %v1535, 7
    %v1554 = vrot.slane %v1536, 1
    %v1555 = vrot.slane %v1536, 2
    %v1556 = vrot.slane %v1536, 3
    %v1557 = vrot.slane %v1536, 4
    %v1558 = vrot.slane %v1536, 5
    %v1559 = vrot.slane %v1536, 6
    %v1560 = vrot.slane %v1536, 7
    %v1585 = vrcp.pop %v1534
    %v1586 = vmul.f32 %v1289, %v1585
    %v1587 = vrcp.pop %v1540
    %v1588 = vmul.f32 %v1295, %v1587
    %v1589 = vrcp.pop %v1541
    %v1590 = vmul.f32 %v1301, %v1589
    %v1591 = vrcp.pop %v1542
    %v1592 = vmul.f32 %v1307, %v1591
    %v1593 = vrcp.pop %v1543
    %v1594 = vmul.f32 %v1313, %v1593
    %v1595 = vrcp.pop %v1544
    %v1596 = vmul.f32 %v1319, %v1595
    %v1597 = vrcp.pop %v1545
    %v1598 = vmul.f32 %v1325, %v1597
    %v1599 = vrcp.pop %v1546
    %v1600 = vmul.f32 %v1331, %v1599
    %v1601 = vrcp.pop %v1535
    %v1602 = vmul.f32 %v1337, %v1601
    %v1603 = vrcp.pop %v1547
    %v1604 = vmul.f32 %v1343, %v1603
    %v1605 = vrcp.pop %v1548
    %v1606 = vmul.f32 %v1349, %v1605
    %v1607 = vrcp.pop %v1549
    %v1608 = vmul.f32 %v1355, %v1607
    %v1609 = vrcp.pop %v1550
    %v1610 = vmul.f32 %v1361, %v1609
    %v1611 = vrcp.pop %v1551
    %v1612 = vmul.f32 %v1367, %v1611
    %v1613 = vrcp.pop %v1552
    %v1614 = vmul.f32 %v1373, %v1613
    %v1615 = vrcp.pop %v1553
    %v1616 = vmul.f32 %v1379, %v1615
    %v1617 = vrcp.pop %v1536
    %v1618 = vmul.f32 %v1385, %v1617
    %v1619 = vrcp.pop %v1554
    %v1620 = vmul.f32 %v1391, %v1619
    %v1621 = vrcp.pop %v1555
    %v1622 = vmul.f32 %v1397, %v1621
    %v1623 = vrcp.pop %v1556
    %v1624 = vmul.f32 %v1403, %v1623
    %v1625 = vrcp.pop %v1557
    %v1626 = vmul.f32 %v1409, %v1625
    %v1627 = vrcp.pop %v1558
    %v1628 = vmul.f32 %v1415, %v1627
    %v1629 = vrcp.pop %v1559
    %v1630 = vmul.f32 %v1421, %v1629
    %v1631 = vrcp.pop %v1560
    %v1632 = vmul.f32 %v1427, %v1631
    %v1657 = vrot.slane %v1588, 7
    %v1658 = vsel %vm1476, %v1657, %v1586
    %v1659 = vrot.slane %v1590, 6
    %v1660 = vsel %vm1478, %v1659, %v1658
    %v1661 = vrot.slane %v1592, 5
    %v1662 = vsel %vm1480, %v1661, %v1660
    %v1663 = vrot.slane %v1594, 4
    %v1664 = vsel %vm1482, %v1663, %v1662
    %v1665 = vrot.slane %v1596, 3
    %v1666 = vsel %vm1484, %v1665, %v1664
    %v1667 = vrot.slane %v1598, 2
    %v1668 = vsel %vm1486, %v1667, %v1666
    %v1669 = vrot.slane %v1600, 1
    %v1670 = vsel %vm1488, %v1669, %v1668
    %v1671 = vrot.slane %v1604, 7
    %v1672 = vsel %vm1476, %v1671, %v1602
    %v1673 = vrot.slane %v1606, 6
    %v1674 = vsel %vm1478, %v1673, %v1672
    %v1675 = vrot.slane %v1608, 5
    %v1676 = vsel %vm1480, %v1675, %v1674
    %v1677 = vrot.slane %v1610, 4
    %v1678 = vsel %vm1482, %v1677, %v1676
    %v1679 = vrot.slane %v1612, 3
    %v1680 = vsel %vm1484, %v1679, %v1678
    %v1681 = vrot.slane %v1614, 2
    %v1682 = vsel %vm1486, %v1681, %v1680
    %v1683 = vrot.slane %v1616, 1
    %v1684 = vsel %vm1488, %v1683, %v1682
    %v1685 = vrot.slane %v1620, 7
    %v1686 = vsel %vm1476, %v1685, %v1618
    %v1687 = vrot.slane %v1622, 6
    %v1688 = vsel %vm1478, %v1687, %v1686
    %v1689 = vrot.slane %v1624, 5
    %v1690 = vsel %vm1480, %v1689, %v1688
    %v1691 = vrot.slane %v1626, 4
    %v1692 = vsel %vm1482, %v1691, %v1690
    %v1693 = vrot.slane %v1628, 3
    %v1694 = vsel %vm1484, %v1693, %v1692
    %v1695 = vrot.slane %v1630, 2
    %v1696 = vsel %vm1486, %v1695, %v1694
    %v1697 = vrot.slane %v1632, 1
    %v1698 = vsel %vm1488, %v1697, %v1696
    %1702 = vst [vmem:[#allocation11] sm:$0xff] %v1670
    %1703 = vst [vmem:[#allocation11 + $0x8] sm:$0xff] %v1684
    %1704 = vst [vmem:[#allocation11 + $0x10] sm:$0xff] %v1698
    // Predicated region
    $region50: #{tpu_custom_call.1} parent=1 // pred_check
      _
    $region51: #{tpu_custom_call.1} parent=1 // pred_check_branch
      %1706 = sbr.rel (0) target = $region53
    $region52: #{tpu_custom_call.1} parent=1 // pred_region
      %s1708 = ssub.s32 384, 384
      %1709 = vsyncadd [#allocation5], %s1708
      %s1710 = sshll.u32 [#allocation11], 4
      %s1711 = int_to_ptr.vmem [resolvable:$true] %s1710
      %1716 = dma.vmem_to_hbm [thread:$0]  %s1711, 384, %s8, [#allocation5], 128, 128, 8
    $region53: #{tpu_custom_call.1} parent=1 // pred_fallthru
      _
    // Predicated region
    $region54: #{tpu_custom_call.1} parent=1 // pred_check
      _
    $region55: #{tpu_custom_call.1} parent=1 // pred_check_branch
      %1718 = sbr.rel (0) target = $region57
    $region56: #{tpu_custom_call.1} parent=1 // pred_region
      %1719 = dma.done [#allocation5], 384
    $region57: #{tpu_custom_call.1} parent=1 // pred_fallthru
      _
    %1720 = vsyncpa [#allocation4], 1
    %1721 = vsyncpa [#allocation7], 1
    %1722 = vsyncpa [#allocation10], 1
    %1723 = vsyncpa [#allocation5], 1

</llo_original>
